<compile_context>
chip_gen: v6e
topology: v6e:2x2x1
jax: 0.10.0
libtpu: 0.0.40
codegen_flags: <defaults>
</compile_context>

<pallas_src>
import functools

import numpy as np
import jax
import jax.numpy as jnp
from jax.experimental import pallas as pl
from jax.experimental.pallas import tpu as pltpu

# tap ordering: t = ky*3 + kx, offsets (dy, dx) = (ky-1, kx-1); center tap = 4
_TAPS = tuple((ky - 1, kx - 1) for ky in range(3) for kx in range(3))


# ----------------------------------------------------------------------------
# Fused FBNet forward kernel (one grid step == TS samples)
# ----------------------------------------------------------------------------
def _fbnet_kernel(x_ref, gwl_ref, masks_ref, pool_ref,
                  w_in_ref, b_in_ref, w_mix_ref, b_mix_ref,
                  w_out_ref, b_out_ref, wc_ref, bc_ref, o_ref,
                  *, W, L, num_mixed, num_ops, c_mid):
    x = x_ref[0]              # (C_pad, L)  with L = TS * H * W (samples on lanes)
    masks = masks_ref[...]    # (9, L)      precomputed border-validity masks
    gwl = gwl_ref[0]          # (num_mixed*num_ops, L) lane-broadcast gumbel weights

    def im2col(h):
        # (C, L) -> (9*C, L): 9 lane-rolled + border-masked copies stacked on sublanes.
        # Rolls that wrap across sample/array boundaries always land on masked taps.
        cols = []
        for t, (dy, dx) in enumerate(_TAPS):
            s = dy * W + dx
            if s == 0:
                cols.append(h)                         # center tap: unrolled, mask == 1
            else:
                hs = pltpu.roll(h, (-s) % L, 1)        # hs[p] = h[(p + s) % L]
                cols.append(hs * masks[t:t + 1])
        return jnp.concatenate(cols, axis=0)

    # --- input conv: single folded (c_mid, 9*C_pad) @ (9*C_pad, L) MXU dot + ReLU
    h = jnp.maximum(
        jnp.dot(w_in_ref[...], im2col(x), preferred_element_type=jnp.float32)
        + b_in_ref[...], 0.0)                          # (c_mid, L)

    # --- mixed layers: [conv3x3 ; conv1x1] fused in ONE stacked matmul,
    #     then per-sample gumbel blend with lane-broadcast weights.
    for l in range(num_mixed):
        rr = jnp.maximum(
            jnp.dot(w_mix_ref[l], im2col(h), preferred_element_type=jnp.float32)
            + b_mix_ref[l], 0.0)                       # (2*c_mid, L): [r3 ; r1]
        w0 = gwl[l * num_ops + 0:l * num_ops + 1]      # (1, L)
        w1 = gwl[l * num_ops + 1:l * num_ops + 2]
        w2 = gwl[l * num_ops + 2:l * num_ops + 3]
        h = w0 * rr[:c_mid] + w1 * rr[c_mid:] + w2 * h

    # --- output conv 1x1 + ReLU -> (dim_feature, L), stays in VMEM
    feat = jnp.maximum(
        jnp.dot(w_out_ref[...], h, preferred_element_type=jnp.float32)
        + b_out_ref[...], 0.0)

    # --- per-sample global average pool (block-diagonal pooling matmul),
    #     then classifier on the pooled (F, TS) features.
    pooled = jnp.dot(feat, pool_ref[...], preferred_element_type=jnp.float32)   # (F, TS)
    logits = jnp.dot(wc_ref[...], pooled, preferred_element_type=jnp.float32) + bc_ref[...]
    o_ref[0] = logits.T                                # (TS, NC): classes lane-dense


def fbnet_fused(x_steps, gwl, masks, pool, w_in, b_in, w_mix, b_mix,
                w_out, b_out, wc, bc, *, W):
    """x_steps: (steps, C_pad, TS*HW); gwl: (steps, L_mix*ops, TS*HW)."""
    num_steps, c_pad, L = x_steps.shape
    ts = pool.shape[1]
    num_mixed = w_mix.shape[0]
    c_mid = w_mix.shape[1] // 2
    num_ops = gwl.shape[1] // num_mixed
    nc = wc.shape[0]

    def whole(a):  # full-array VMEM block, constant index -> fetched once
        nd = a.ndim
        return pl.BlockSpec(a.shape, lambda i, _nd=nd: (0,) * _nd)

    kernel = functools.partial(_fbnet_kernel, W=W, L=L, num_mixed=num_mixed,
                               num_ops=num_ops, c_mid=c_mid)

    out = pl.pallas_call(
        kernel,
        out_shape=jax.ShapeDtypeStruct((num_steps, ts, nc), jnp.float32),
        grid=(num_steps,),
        in_specs=[
            pl.BlockSpec((1, c_pad, L), lambda i: (i, 0, 0)),           # sample slab
            pl.BlockSpec((1, num_mixed * num_ops, L), lambda i: (i, 0, 0)),  # gumbel weights
            whole(masks), whole(pool),
            whole(w_in), whole(b_in), whole(w_mix), whole(b_mix),
            whole(w_out), whole(b_out), whole(wc), whole(bc),
        ],
        out_specs=pl.BlockSpec((1, ts, nc), lambda i: (i, 0, 0)),
        compiler_params=pltpu.CompilerParams(
            dimension_semantics=("parallel",)),        # v7x: one step per TensorCore
    )(x_steps, gwl, masks, pool, w_in, b_in, w_mix, b_mix, w_out, b_out, wc, bc)
    return out.reshape(num_steps * ts, nc)


# ----------------------------------------------------------------------------
# Host-side precomputation / weight folding
# ----------------------------------------------------------------------------
def _make_masks_and_pool(H, W, ts):
    HW = H * W
    L = ts * HW
    p = np.arange(L)
    m = p % HW
    yy, xx = m // W, m % W
    masks = []
    for dy, dx in _TAPS:
        ok = (yy + dy >= 0) & (yy + dy < H) & (xx + dx >= 0) & (xx + dx < W)
        masks.append(ok.astype(np.float32))
    masks = np.stack(masks, axis=0)                      # (9, L)
    pool = np.zeros((L, ts), np.float32)
    pool[p, p // HW] = 1.0 / HW                          # per-sample average pool
    return jnp.asarray(masks), jnp.asarray(pool)


def _fold_conv3x3(w, c_pad):
    # w: (C_out, C_in, 3, 3) -> (C_out, 9*c_pad); column index = tap*c_pad + cin
    c_out, c_in = w.shape[:2]
    wt = jnp.transpose(w, (0, 2, 3, 1)).reshape(c_out, 9, c_in)
    wt = jnp.pad(wt, ((0, 0), (0, 0), (0, c_pad - c_in)))
    return wt.reshape(c_out, 9 * c_pad)


def _mixed_weight(w3, w1, c_mid):
    # stacked [conv3x3 ; conv1x1] weight: (2*c_mid, 9*c_mid)
    top = _fold_conv3x3(w3, c_mid)
    bot = jnp.zeros((c_mid, 9 * c_mid), jnp.float32)
    bot = bot.at[:, 4 * c_mid:5 * c_mid].set(w1)          # center-tap columns
    return jnp.concatenate([top, bot], axis=0)


# ----------------------------------------------------------------------------
# JAX glue: gumbel-softmax, parameter setup
# ----------------------------------------------------------------------------
def gumbel_softmax(key, logits, temperature):
    u = jax.random.uniform(key, logits.shape, minval=1e-10, maxval=1.0)
    g = -jnp.log(-jnp.log(u))
    return jax.nn.softmax((logits + g) / temperature, axis=-1)


def init_params(key, c_in=4, c_mid=8, dim_feature=32, num_classes=10,
                num_mixed=2, init_theta=1.0):
    ks = jax.random.split(key, 4 + 2 * num_mixed)
    p = {}
    p["w_in"] = 0.1 * jax.random.normal(ks[0], (c_mid, c_in, 3, 3), jnp.float32)
    p["b_in"] = jnp.zeros((c_mid,), jnp.float32)
    p["w3"], p["b3"], p["w1"], p["b1"] = [], [], [], []
    for l in range(num_mixed):
        p["w3"].append(0.1 * jax.random.normal(ks[1 + 2 * l], (c_mid, c_mid, 3, 3), jnp.float32))
        p["b3"].append(jnp.zeros((c_mid,), jnp.float32))
        p["w1"].append(0.1 * jax.random.normal(ks[2 + 2 * l], (c_mid, c_mid), jnp.float32))
        p["b1"].append(jnp.zeros((c_mid,), jnp.float32))
    p["w_out"] = 0.1 * jax.random.normal(ks[1 + 2 * num_mixed], (dim_feature, c_mid), jnp.float32)
    p["b_out"] = jnp.zeros((dim_feature,), jnp.float32)
    p["wc"] = 0.1 * jax.random.normal(ks[2 + 2 * num_mixed], (num_classes, dim_feature), jnp.float32)
    p["bc"] = jnp.zeros((num_classes,), jnp.float32)
    p["theta"] = jnp.full((num_mixed, 3), init_theta, jnp.float32)
    # synthetic speed.txt / energy.txt tables (rows: mixed layers, cols: ops)
    p["speed"] = jnp.array([[1.0, 2.0, 3.0], [4.0, 5.0, 6.0]], jnp.float32)
    p["energy"] = jnp.array([[0.5, 1.5, 2.5], [3.5, 4.5, 5.5]], jnp.float32)
    return p


# ----------------------------------------------------------------------------
# FBNet forward
# ----------------------------------------------------------------------------
def fbnet_forward(params, x_nchw, target, gumbel_key, temperature=5.0,
                  alpha=0.0, beta=0.0, gamma=0.0, delta=0.0, num_classes=10):
    N, c_in, H, W = x_nchw.shape
    HW = H * W
    c_mid = params["w_in"].shape[0]
    num_mixed, num_ops = params["theta"].shape
    assert num_ops == 3, "kernel implements exactly [conv3x3, conv1x1, identity]"

    # architecture (gumbel-softmax) weights: (num_mixed, N, num_ops)
    keys = jax.random.split(gumbel_key, num_mixed)
    gw = jnp.stack([
        gumbel_softmax(keys[l], jnp.tile(params["theta"][l], (N, 1)), temperature)
        for l in range(num_mixed)], axis=0)

    # grid sizing: 2 steps feeds both v7x TensorCores; TS capped for VMEM headroom
    max_ts = 64
    num_steps = max(min(2, N), -(-N // max_ts))
    ts = -(-N // num_steps)
    n_pad = ts * num_steps
    L = ts * HW

    # channel-major (C_pad, TS*HW) input layout, samples concatenated on lanes
    x = x_nchw.reshape(N, c_in, HW).astype(jnp.float32)
    x = jnp.pad(x, ((0, n_pad - N), (0, c_mid - c_in), (0, 0)))
    x_steps = x.reshape(num_steps, ts, c_mid, HW).transpose(0, 2, 1, 3).reshape(
        num_steps, c_mid, L)

    # lane-broadcast per-sample gumbel weights: (steps, num_mixed*num_ops, L)
    gw_pad = jnp.pad(gw, ((0, 0), (0, n_pad - N), (0, 0)))
    gwl = jnp.repeat(gw_pad.transpose(0, 2, 1), HW, axis=2)
    gwl = gwl.reshape(num_mixed * num_ops, num_steps, L).transpose(1, 0, 2)

    # static border masks + per-sample average-pool matrix (host precomputed)
    masks, pool = _make_masks_and_pool(H, W, ts)

    # fold conv weights into im2col layout, stack mixed-op candidates
    w_in = _fold_conv3x3(params["w_in"], c_mid)
    b_in = params["b_in"].reshape(c_mid, 1)
    w_mix = jnp.stack([_mixed_weight(params["w3"][l], params["w1"][l], c_mid)
                       for l in range(num_mixed)], axis=0)
    b_mix = jnp.stack([jnp.concatenate([params["b3"][l], params["b1"][l]]).reshape(2 * c_mid, 1)
                       for l in range(num_mixed)], axis=0)
    w_out = params["w_out"]
    b_out = params["b_out"].reshape(-1, 1)
    wc = params["wc"]
    bc = params["bc"].reshape(-1, 1)

    # one fused Pallas kernel for the whole network
    logits = fbnet_fused(x_steps, gwl, masks, pool, w_in, b_in, w_mix, b_mix,
                         w_out, b_out, wc, bc, W=W)[:N]              # (N, NC)

    # tiny scalar tail (CE, latency/energy losses, accuracy) stays in XLA
    lat_loss = jnp.sum(gw * params["speed"][:, None, :num_ops]) / N
    ener_loss = jnp.sum(gw * params["energy"][:, None, :num_ops]) / N
    logp = jax.nn.log_softmax(logits, axis=-1)
    onehot = jax.nn.one_hot(target, num_classes, dtype=jnp.float32)
    ce = -jnp.mean(jnp.sum(onehot * logp, axis=-1))
    loss = ce + alpha * lat_loss ** beta + gamma * ener_loss ** delta
    pred = jnp.argmax(logits, axis=1)
    acc = jnp.mean((pred == target).astype(jnp.float32))
    return loss, ce, lat_loss, acc, ener_loss


# ----------------------------------------------------------------------------
if __name__ == "__main__":
    key = jax.random.PRNGKey(0)
    k_param, k_data, k_tgt, k_gumbel = jax.random.split(key, 4)

    N, C_IN, SIDE, NUM_CLASSES = 2, 4, 16, 10
    params = init_params(k_param, c_in=C_IN, c_mid=8, dim_feature=32,
                         num_classes=NUM_CLASSES, num_mixed=2, init_theta=1.0)
    x = jax.random.normal(k_data, (N, C_IN, SIDE, SIDE), jnp.float32)   # NCHW like PyTorch
    target = jax.random.randint(k_tgt, (N,), 0, NUM_CLASSES)

    fwd = jax.jit(fbnet_forward)
    out = fwd(params, x, target, k_gumbel)
    out = jax.block_until_ready(out)
    loss, ce, lat_loss, acc, ener_loss = out
    assert all(jnp.isfinite(jnp.asarray(v)).all() for v in out)
    print("KERNEL_OK")
</pallas_src>

<mosaic_0001>
module attributes {stable_mosaic.version = 11 : i64} {
  func.func @_fbnet_kernel(%arg0: i32, %arg1: memref<1x8x256xf32, #tpu.memory_space<vmem>>, %arg2: memref<1x6x256xf32, #tpu.memory_space<vmem>>, %arg3: memref<9x256xf32, #tpu.memory_space<vmem>>, %arg4: memref<256x1xf32, #tpu.memory_space<vmem>>, %arg5: memref<8x72xf32, #tpu.memory_space<vmem>>, %arg6: memref<8x1xf32, #tpu.memory_space<vmem>>, %arg7: memref<2x16x72xf32, #tpu.memory_space<vmem>>, %arg8: memref<2x16x1xf32, #tpu.memory_space<vmem>>, %arg9: memref<32x8xf32, #tpu.memory_space<vmem>>, %arg10: memref<32x1xf32, #tpu.memory_space<vmem>>, %arg11: memref<10x32xf32, #tpu.memory_space<vmem>>, %arg12: memref<10x1xf32, #tpu.memory_space<vmem>>, %arg13: memref<1x1x10xf32, #tpu.memory_space<vmem>>) attributes {dimension_semantics = [#tpu.dimension_semantics<parallel>], iteration_bounds = array<i64: 2>, scalar_prefetch = 0 : i64, scratch_operands = 0 : i64, tpu.core_type = #tpu.core_type<tc>, window_params = [{transform_indices = @transform_0, window_bounds = array<i64: 1, 8, 256>}, {transform_indices = @transform_1, window_bounds = array<i64: 1, 6, 256>}, {pipeline_mode = #tpu.pipeline_mode<synchronous>, transform_indices = @transform_2, window_bounds = array<i64: 9, 256>}, {pipeline_mode = #tpu.pipeline_mode<synchronous>, transform_indices = @transform_3, window_bounds = array<i64: 256, 1>}, {pipeline_mode = #tpu.pipeline_mode<synchronous>, transform_indices = @transform_4, window_bounds = array<i64: 8, 72>}, {pipeline_mode = #tpu.pipeline_mode<synchronous>, transform_indices = @transform_5, window_bounds = array<i64: 8, 1>}, {pipeline_mode = #tpu.pipeline_mode<synchronous>, transform_indices = @transform_6, window_bounds = array<i64: 2, 16, 72>}, {pipeline_mode = #tpu.pipeline_mode<synchronous>, transform_indices = @transform_7, window_bounds = array<i64: 2, 16, 1>}, {pipeline_mode = #tpu.pipeline_mode<synchronous>, transform_indices = @transform_8, window_bounds = array<i64: 32, 8>}, {pipeline_mode = #tpu.pipeline_mode<synchronous>, transform_indices = @transform_9, window_bounds = array<i64: 32, 1>}, {pipeline_mode = #tpu.pipeline_mode<synchronous>, transform_indices = @transform_10, window_bounds = array<i64: 10, 32>}, {pipeline_mode = #tpu.pipeline_mode<synchronous>, transform_indices = @transform_11, window_bounds = array<i64: 10, 1>}, {transform_indices = @transform_12, window_bounds = array<i64: 1, 1, 10>}]} {
    %c0 = arith.constant 0 : index
    %c0_0 = arith.constant 0 : index
    %c0_1 = arith.constant 0 : index
    %0 = vector.load %arg1[%c0, %c0_0, %c0_1] : memref<1x8x256xf32, #tpu.memory_space<vmem>>, vector<1x8x256xf32>
    %1 = vector.shape_cast %0 : vector<1x8x256xf32> to vector<8x256xf32>
    %c0_2 = arith.constant 0 : index
    %c0_3 = arith.constant 0 : index
    %2 = vector.load %arg3[%c0_2, %c0_3] : memref<9x256xf32, #tpu.memory_space<vmem>>, vector<9x256xf32>
    %c0_4 = arith.constant 0 : index
    %c0_5 = arith.constant 0 : index
    %c0_6 = arith.constant 0 : index
    %3 = vector.load %arg2[%c0_4, %c0_5, %c0_6] : memref<1x6x256xf32, #tpu.memory_space<vmem>>, vector<1x6x256xf32>
    %4 = vector.shape_cast %3 : vector<1x6x256xf32> to vector<6x256xf32>
    %c0_7 = arith.constant 0 : index
    %c0_8 = arith.constant 0 : index
    %5 = vector.load %arg5[%c0_7, %c0_8] : memref<8x72xf32, #tpu.memory_space<vmem>>, vector<8x72xf32>
    %c17_i32 = arith.constant 17 : i32
    %6 = tpu.dynamic_rotate %1 by %c17_i32 dim 1 : vector<8x256xf32>, i32 -> vector<8x256xf32>
    %7 = vector.extract_strided_slice %2 {offsets = [0, 0], sizes = [1, 256], strides = [1, 1]} : vector<9x256xf32> to vector<1x256xf32>
    %8 = vector.broadcast %7 : vector<1x256xf32> to vector<8x256xf32>
    %9 = arith.mulf %6, %8 : vector<8x256xf32>
    %c16_i32 = arith.constant 16 : i32
    %10 = tpu.dynamic_rotate %1 by %c16_i32 dim 1 : vector<8x256xf32>, i32 -> vector<8x256xf32>
    %11 = vector.extract_strided_slice %2 {offsets = [1, 0], sizes = [1, 256], strides = [1, 1]} : vector<9x256xf32> to vector<1x256xf32>
    %12 = vector.broadcast %11 : vector<1x256xf32> to vector<8x256xf32>
    %13 = arith.mulf %10, %12 : vector<8x256xf32>
    %c15_i32 = arith.constant 15 : i32
    %14 = tpu.dynamic_rotate %1 by %c15_i32 dim 1 : vector<8x256xf32>, i32 -> vector<8x256xf32>
    %15 = vector.extract_strided_slice %2 {offsets = [2, 0], sizes = [1, 256], strides = [1, 1]} : vector<9x256xf32> to vector<1x256xf32>
    %16 = vector.broadcast %15 : vector<1x256xf32> to vector<8x256xf32>
    %17 = arith.mulf %14, %16 : vector<8x256xf32>
    %c1_i32 = arith.constant 1 : i32
    %18 = tpu.dynamic_rotate %1 by %c1_i32 dim 1 : vector<8x256xf32>, i32 -> vector<8x256xf32>
    %19 = vector.extract_strided_slice %2 {offsets = [3, 0], sizes = [1, 256], strides = [1, 1]} : vector<9x256xf32> to vector<1x256xf32>
    %20 = vector.broadcast %19 : vector<1x256xf32> to vector<8x256xf32>
    %21 = arith.mulf %18, %20 : vector<8x256xf32>
    %c255_i32 = arith.constant 255 : i32
    %22 = tpu.dynamic_rotate %1 by %c255_i32 dim 1 : vector<8x256xf32>, i32 -> vector<8x256xf32>
    %23 = vector.extract_strided_slice %2 {offsets = [5, 0], sizes = [1, 256], strides = [1, 1]} : vector<9x256xf32> to vector<1x256xf32>
    %24 = vector.broadcast %23 : vector<1x256xf32> to vector<8x256xf32>
    %25 = arith.mulf %22, %24 : vector<8x256xf32>
    %c241_i32 = arith.constant 241 : i32
    %26 = tpu.dynamic_rotate %1 by %c241_i32 dim 1 : vector<8x256xf32>, i32 -> vector<8x256xf32>
    %27 = vector.extract_strided_slice %2 {offsets = [6, 0], sizes = [1, 256], strides = [1, 1]} : vector<9x256xf32> to vector<1x256xf32>
    %28 = vector.broadcast %27 : vector<1x256xf32> to vector<8x256xf32>
    %29 = arith.mulf %26, %28 : vector<8x256xf32>
    %c240_i32 = arith.constant 240 : i32
    %30 = tpu.dynamic_rotate %1 by %c240_i32 dim 1 : vector<8x256xf32>, i32 -> vector<8x256xf32>
    %31 = vector.extract_strided_slice %2 {offsets = [7, 0], sizes = [1, 256], strides = [1, 1]} : vector<9x256xf32> to vector<1x256xf32>
    %32 = vector.broadcast %31 : vector<1x256xf32> to vector<8x256xf32>
    %33 = arith.mulf %30, %32 : vector<8x256xf32>
    %c239_i32 = arith.constant 239 : i32
    %34 = tpu.dynamic_rotate %1 by %c239_i32 dim 1 : vector<8x256xf32>, i32 -> vector<8x256xf32>
    %35 = vector.extract_strided_slice %2 {offsets = [8, 0], sizes = [1, 256], strides = [1, 1]} : vector<9x256xf32> to vector<1x256xf32>
    %36 = vector.broadcast %35 : vector<1x256xf32> to vector<8x256xf32>
    %37 = arith.mulf %34, %36 : vector<8x256xf32>
    %38 = tpu.concatenate %9, %13, %17, %21, %1, %25, %29, %33, %37 in 0 : vector<8x256xf32>, vector<8x256xf32>, vector<8x256xf32>, vector<8x256xf32>, vector<8x256xf32>, vector<8x256xf32>, vector<8x256xf32>, vector<8x256xf32>, vector<8x256xf32> -> vector<72x256xf32>
    %cst = arith.constant dense<0.000000e+00> : vector<8x256xf32>
    %39 = tpu.matmul %5, %38, %cst {dimension_numbers = #tpu.dot_dimension_numbers<[1], [0], [0], [1], [0, 0, 1, 1], [], []>} : vector<8x72xf32>, vector<72x256xf32>, vector<8x256xf32> -> vector<8x256xf32>
    %c0_9 = arith.constant 0 : index
    %c0_10 = arith.constant 0 : index
    %40 = vector.load %arg6[%c0_9, %c0_10] : memref<8x1xf32, #tpu.memory_space<vmem>>, vector<8x1xf32>
    %41 = vector.broadcast %40 : vector<8x1xf32> to vector<8x256xf32>
    %42 = arith.addf %39, %41 : vector<8x256xf32>
    %cst_11 = arith.constant 0.000000e+00 : f32
    %43 = vector.broadcast %cst_11 : f32 to vector<8x256xf32>
    %44 = arith.maximumf %42, %43 : vector<8x256xf32>
    %c0_12 = arith.constant 0 : index
    %c0_13 = arith.constant 0 : index
    %c0_14 = arith.constant 0 : index
    %45 = vector.load %arg7[%c0_12, %c0_13, %c0_14] : memref<2x16x72xf32, #tpu.memory_space<vmem>>, vector<1x16x72xf32>
    %46 = vector.shape_cast %45 : vector<1x16x72xf32> to vector<16x72xf32>
    %c17_i32_15 = arith.constant 17 : i32
    %47 = tpu.dynamic_rotate %44 by %c17_i32_15 dim 1 : vector<8x256xf32>, i32 -> vector<8x256xf32>
    %48 = vector.extract_strided_slice %2 {offsets = [0, 0], sizes = [1, 256], strides = [1, 1]} : vector<9x256xf32> to vector<1x256xf32>
    %49 = vector.broadcast %48 : vector<1x256xf32> to vector<8x256xf32>
    %50 = arith.mulf %47, %49 : vector<8x256xf32>
    %c16_i32_16 = arith.constant 16 : i32
    %51 = tpu.dynamic_rotate %44 by %c16_i32_16 dim 1 : vector<8x256xf32>, i32 -> vector<8x256xf32>
    %52 = vector.extract_strided_slice %2 {offsets = [1, 0], sizes = [1, 256], strides = [1, 1]} : vector<9x256xf32> to vector<1x256xf32>
    %53 = vector.broadcast %52 : vector<1x256xf32> to vector<8x256xf32>
    %54 = arith.mulf %51, %53 : vector<8x256xf32>
    %c15_i32_17 = arith.constant 15 : i32
    %55 = tpu.dynamic_rotate %44 by %c15_i32_17 dim 1 : vector<8x256xf32>, i32 -> vector<8x256xf32>
    %56 = vector.extract_strided_slice %2 {offsets = [2, 0], sizes = [1, 256], strides = [1, 1]} : vector<9x256xf32> to vector<1x256xf32>
    %57 = vector.broadcast %56 : vector<1x256xf32> to vector<8x256xf32>
    %58 = arith.mulf %55, %57 : vector<8x256xf32>
    %c1_i32_18 = arith.constant 1 : i32
    %59 = tpu.dynamic_rotate %44 by %c1_i32_18 dim 1 : vector<8x256xf32>, i32 -> vector<8x256xf32>
    %60 = vector.extract_strided_slice %2 {offsets = [3, 0], sizes = [1, 256], strides = [1, 1]} : vector<9x256xf32> to vector<1x256xf32>
    %61 = vector.broadcast %60 : vector<1x256xf32> to vector<8x256xf32>
    %62 = arith.mulf %59, %61 : vector<8x256xf32>
    %c255_i32_19 = arith.constant 255 : i32
    %63 = tpu.dynamic_rotate %44 by %c255_i32_19 dim 1 : vector<8x256xf32>, i32 -> vector<8x256xf32>
    %64 = vector.extract_strided_slice %2 {offsets = [5, 0], sizes = [1, 256], strides = [1, 1]} : vector<9x256xf32> to vector<1x256xf32>
    %65 = vector.broadcast %64 : vector<1x256xf32> to vector<8x256xf32>
    %66 = arith.mulf %63, %65 : vector<8x256xf32>
    %c241_i32_20 = arith.constant 241 : i32
    %67 = tpu.dynamic_rotate %44 by %c241_i32_20 dim 1 : vector<8x256xf32>, i32 -> vector<8x256xf32>
    %68 = vector.extract_strided_slice %2 {offsets = [6, 0], sizes = [1, 256], strides = [1, 1]} : vector<9x256xf32> to vector<1x256xf32>
    %69 = vector.broadcast %68 : vector<1x256xf32> to vector<8x256xf32>
    %70 = arith.mulf %67, %69 : vector<8x256xf32>
    %c240_i32_21 = arith.constant 240 : i32
    %71 = tpu.dynamic_rotate %44 by %c240_i32_21 dim 1 : vector<8x256xf32>, i32 -> vector<8x256xf32>
    %72 = vector.extract_strided_slice %2 {offsets = [7, 0], sizes = [1, 256], strides = [1, 1]} : vector<9x256xf32> to vector<1x256xf32>
    %73 = vector.broadcast %72 : vector<1x256xf32> to vector<8x256xf32>
    %74 = arith.mulf %71, %73 : vector<8x256xf32>
    %c239_i32_22 = arith.constant 239 : i32
    %75 = tpu.dynamic_rotate %44 by %c239_i32_22 dim 1 : vector<8x256xf32>, i32 -> vector<8x256xf32>
    %76 = vector.extract_strided_slice %2 {offsets = [8, 0], sizes = [1, 256], strides = [1, 1]} : vector<9x256xf32> to vector<1x256xf32>
    %77 = vector.broadcast %76 : vector<1x256xf32> to vector<8x256xf32>
    %78 = arith.mulf %75, %77 : vector<8x256xf32>
    %79 = tpu.concatenate %50, %54, %58, %62, %44, %66, %70, %74, %78 in 0 : vector<8x256xf32>, vector<8x256xf32>, vector<8x256xf32>, vector<8x256xf32>, vector<8x256xf32>, vector<8x256xf32>, vector<8x256xf32>, vector<8x256xf32>, vector<8x256xf32> -> vector<72x256xf32>
    %cst_23 = arith.constant dense<0.000000e+00> : vector<16x256xf32>
    %80 = tpu.matmul %46, %79, %cst_23 {dimension_numbers = #tpu.dot_dimension_numbers<[1], [0], [0], [1], [0, 0, 1, 1], [], []>} : vector<16x72xf32>, vector<72x256xf32>, vector<16x256xf32> -> vector<16x256xf32>
    %c0_24 = arith.constant 0 : index
    %c0_25 = arith.constant 0 : index
    %c0_26 = arith.constant 0 : index
    %81 = vector.load %arg8[%c0_24, %c0_25, %c0_26] : memref<2x16x1xf32, #tpu.memory_space<vmem>>, vector<1x16x1xf32>
    %82 = vector.shape_cast %81 : vector<1x16x1xf32> to vector<16x1xf32>
    %83 = vector.broadcast %82 : vector<16x1xf32> to vector<16x256xf32>
    %84 = arith.addf %80, %83 : vector<16x256xf32>
    %cst_27 = arith.constant 0.000000e+00 : f32
    %85 = vector.broadcast %cst_27 : f32 to vector<16x256xf32>
    %86 = arith.maximumf %84, %85 : vector<16x256xf32>
    %87 = vector.extract_strided_slice %4 {offsets = [0, 0], sizes = [1, 256], strides = [1, 1]} : vector<6x256xf32> to vector<1x256xf32>
    %88 = vector.extract_strided_slice %4 {offsets = [1, 0], sizes = [1, 256], strides = [1, 1]} : vector<6x256xf32> to vector<1x256xf32>
    %89 = vector.extract_strided_slice %4 {offsets = [2, 0], sizes = [1, 256], strides = [1, 1]} : vector<6x256xf32> to vector<1x256xf32>
    %90 = vector.extract_strided_slice %86 {offsets = [0, 0], sizes = [8, 256], strides = [1, 1]} : vector<16x256xf32> to vector<8x256xf32>
    %91 = vector.broadcast %87 : vector<1x256xf32> to vector<8x256xf32>
    %92 = arith.mulf %91, %90 : vector<8x256xf32>
    %93 = vector.extract_strided_slice %86 {offsets = [8, 0], sizes = [8, 256], strides = [1, 1]} : vector<16x256xf32> to vector<8x256xf32>
    %94 = vector.broadcast %88 : vector<1x256xf32> to vector<8x256xf32>
    %95 = arith.mulf %94, %93 : vector<8x256xf32>
    %96 = arith.addf %92, %95 : vector<8x256xf32>
    %97 = vector.broadcast %89 : vector<1x256xf32> to vector<8x256xf32>
    %98 = arith.mulf %97, %44 : vector<8x256xf32>
    %99 = arith.addf %96, %98 : vector<8x256xf32>
    %c1 = arith.constant 1 : index
    %c0_28 = arith.constant 0 : index
    %c0_29 = arith.constant 0 : index
    %100 = vector.load %arg7[%c1, %c0_28, %c0_29] : memref<2x16x72xf32, #tpu.memory_space<vmem>>, vector<1x16x72xf32>
    %101 = vector.shape_cast %100 : vector<1x16x72xf32> to vector<16x72xf32>
    %c17_i32_30 = arith.constant 17 : i32
    %102 = tpu.dynamic_rotate %99 by %c17_i32_30 dim 1 : vector<8x256xf32>, i32 -> vector<8x256xf32>
    %103 = vector.extract_strided_slice %2 {offsets = [0, 0], sizes = [1, 256], strides = [1, 1]} : vector<9x256xf32> to vector<1x256xf32>
    %104 = vector.broadcast %103 : vector<1x256xf32> to vector<8x256xf32>
    %105 = arith.mulf %102, %104 : vector<8x256xf32>
    %c16_i32_31 = arith.constant 16 : i32
    %106 = tpu.dynamic_rotate %99 by %c16_i32_31 dim 1 : vector<8x256xf32>, i32 -> vector<8x256xf32>
    %107 = vector.extract_strided_slice %2 {offsets = [1, 0], sizes = [1, 256], strides = [1, 1]} : vector<9x256xf32> to vector<1x256xf32>
    %108 = vector.broadcast %107 : vector<1x256xf32> to vector<8x256xf32>
    %109 = arith.mulf %106, %108 : vector<8x256xf32>
    %c15_i32_32 = arith.constant 15 : i32
    %110 = tpu.dynamic_rotate %99 by %c15_i32_32 dim 1 : vector<8x256xf32>, i32 -> vector<8x256xf32>
    %111 = vector.extract_strided_slice %2 {offsets = [2, 0], sizes = [1, 256], strides = [1, 1]} : vector<9x256xf32> to vector<1x256xf32>
    %112 = vector.broadcast %111 : vector<1x256xf32> to vector<8x256xf32>
    %113 = arith.mulf %110, %112 : vector<8x256xf32>
    %c1_i32_33 = arith.constant 1 : i32
    %114 = tpu.dynamic_rotate %99 by %c1_i32_33 dim 1 : vector<8x256xf32>, i32 -> vector<8x256xf32>
    %115 = vector.extract_strided_slice %2 {offsets = [3, 0], sizes = [1, 256], strides = [1, 1]} : vector<9x256xf32> to vector<1x256xf32>
    %116 = vector.broadcast %115 : vector<1x256xf32> to vector<8x256xf32>
    %117 = arith.mulf %114, %116 : vector<8x256xf32>
    %c255_i32_34 = arith.constant 255 : i32
    %118 = tpu.dynamic_rotate %99 by %c255_i32_34 dim 1 : vector<8x256xf32>, i32 -> vector<8x256xf32>
    %119 = vector.extract_strided_slice %2 {offsets = [5, 0], sizes = [1, 256], strides = [1, 1]} : vector<9x256xf32> to vector<1x256xf32>
    %120 = vector.broadcast %119 : vector<1x256xf32> to vector<8x256xf32>
    %121 = arith.mulf %118, %120 : vector<8x256xf32>
    %c241_i32_35 = arith.constant 241 : i32
    %122 = tpu.dynamic_rotate %99 by %c241_i32_35 dim 1 : vector<8x256xf32>, i32 -> vector<8x256xf32>
    %123 = vector.extract_strided_slice %2 {offsets = [6, 0], sizes = [1, 256], strides = [1, 1]} : vector<9x256xf32> to vector<1x256xf32>
    %124 = vector.broadcast %123 : vector<1x256xf32> to vector<8x256xf32>
    %125 = arith.mulf %122, %124 : vector<8x256xf32>
    %c240_i32_36 = arith.constant 240 : i32
    %126 = tpu.dynamic_rotate %99 by %c240_i32_36 dim 1 : vector<8x256xf32>, i32 -> vector<8x256xf32>
    %127 = vector.extract_strided_slice %2 {offsets = [7, 0], sizes = [1, 256], strides = [1, 1]} : vector<9x256xf32> to vector<1x256xf32>
    %128 = vector.broadcast %127 : vector<1x256xf32> to vector<8x256xf32>
    %129 = arith.mulf %126, %128 : vector<8x256xf32>
    %c239_i32_37 = arith.constant 239 : i32
    %130 = tpu.dynamic_rotate %99 by %c239_i32_37 dim 1 : vector<8x256xf32>, i32 -> vector<8x256xf32>
    %131 = vector.extract_strided_slice %2 {offsets = [8, 0], sizes = [1, 256], strides = [1, 1]} : vector<9x256xf32> to vector<1x256xf32>
    %132 = vector.broadcast %131 : vector<1x256xf32> to vector<8x256xf32>
    %133 = arith.mulf %130, %132 : vector<8x256xf32>
    %134 = tpu.concatenate %105, %109, %113, %117, %99, %121, %125, %129, %133 in 0 : vector<8x256xf32>, vector<8x256xf32>, vector<8x256xf32>, vector<8x256xf32>, vector<8x256xf32>, vector<8x256xf32>, vector<8x256xf32>, vector<8x256xf32>, vector<8x256xf32> -> vector<72x256xf32>
    %cst_38 = arith.constant dense<0.000000e+00> : vector<16x256xf32>
    %135 = tpu.matmul %101, %134, %cst_38 {dimension_numbers = #tpu.dot_dimension_numbers<[1], [0], [0], [1], [0, 0, 1, 1], [], []>} : vector<16x72xf32>, vector<72x256xf32>, vector<16x256xf32> -> vector<16x256xf32>
    %c1_39 = arith.constant 1 : index
    %c0_40 = arith.constant 0 : index
    %c0_41 = arith.constant 0 : index
    %136 = vector.load %arg8[%c1_39, %c0_40, %c0_41] : memref<2x16x1xf32, #tpu.memory_space<vmem>>, vector<1x16x1xf32>
    %137 = vector.shape_cast %136 : vector<1x16x1xf32> to vector<16x1xf32>
    %138 = vector.broadcast %137 : vector<16x1xf32> to vector<16x256xf32>
    %139 = arith.addf %135, %138 : vector<16x256xf32>
    %cst_42 = arith.constant 0.000000e+00 : f32
    %140 = vector.broadcast %cst_42 : f32 to vector<16x256xf32>
    %141 = arith.maximumf %139, %140 : vector<16x256xf32>
    %142 = vector.extract_strided_slice %4 {offsets = [3, 0], sizes = [1, 256], strides = [1, 1]} : vector<6x256xf32> to vector<1x256xf32>
    %143 = vector.extract_strided_slice %4 {offsets = [4, 0], sizes = [1, 256], strides = [1, 1]} : vector<6x256xf32> to vector<1x256xf32>
    %144 = vector.extract_strided_slice %4 {offsets = [5, 0], sizes = [1, 256], strides = [1, 1]} : vector<6x256xf32> to vector<1x256xf32>
    %145 = vector.extract_strided_slice %141 {offsets = [0, 0], sizes = [8, 256], strides = [1, 1]} : vector<16x256xf32> to vector<8x256xf32>
    %146 = vector.broadcast %142 : vector<1x256xf32> to vector<8x256xf32>
    %147 = arith.mulf %146, %145 : vector<8x256xf32>
    %148 = vector.extract_strided_slice %141 {offsets = [8, 0], sizes = [8, 256], strides = [1, 1]} : vector<16x256xf32> to vector<8x256xf32>
    %149 = vector.broadcast %143 : vector<1x256xf32> to vector<8x256xf32>
    %150 = arith.mulf %149, %148 : vector<8x256xf32>
    %151 = arith.addf %147, %150 : vector<8x256xf32>
    %152 = vector.broadcast %144 : vector<1x256xf32> to vector<8x256xf32>
    %153 = arith.mulf %152, %99 : vector<8x256xf32>
    %154 = arith.addf %151, %153 : vector<8x256xf32>
    %c0_43 = arith.constant 0 : index
    %c0_44 = arith.constant 0 : index
    %155 = vector.load %arg9[%c0_43, %c0_44] : memref<32x8xf32, #tpu.memory_space<vmem>>, vector<32x8xf32>
    %cst_45 = arith.constant dense<0.000000e+00> : vector<32x256xf32>
    %156 = tpu.matmul %155, %154, %cst_45 {dimension_numbers = #tpu.dot_dimension_numbers<[1], [0], [0], [1], [0, 0, 1, 1], [], []>} : vector<32x8xf32>, vector<8x256xf32>, vector<32x256xf32> -> vector<32x256xf32>
    %c0_46 = arith.constant 0 : index
    %c0_47 = arith.constant 0 : index
    %157 = vector.load %arg10[%c0_46, %c0_47] : memref<32x1xf32, #tpu.memory_space<vmem>>, vector<32x1xf32>
    %158 = vector.broadcast %157 : vector<32x1xf32> to vector<32x256xf32>
    %159 = arith.addf %156, %158 : vector<32x256xf32>
    %cst_48 = arith.constant 0.000000e+00 : f32
    %160 = vector.broadcast %cst_48 : f32 to vector<32x256xf32>
    %161 = arith.maximumf %159, %160 : vector<32x256xf32>
    %c0_49 = arith.constant 0 : index
    %c0_50 = arith.constant 0 : index
    %162 = vector.load %arg4[%c0_49, %c0_50] : memref<256x1xf32, #tpu.memory_space<vmem>>, vector<256x1xf32>
    %cst_51 = arith.constant dense<0.000000e+00> : vector<32x1xf32>
    %163 = tpu.matmul %161, %162, %cst_51 {dimension_numbers = #tpu.dot_dimension_numbers<[1], [0], [0], [1], [0, 0, 1, 1], [], []>} : vector<32x256xf32>, vector<256x1xf32>, vector<32x1xf32> -> vector<32x1xf32>
    %c0_52 = arith.constant 0 : index
    %c0_53 = arith.constant 0 : index
    %164 = vector.load %arg11[%c0_52, %c0_53] : memref<10x32xf32, #tpu.memory_space<vmem>>, vector<10x32xf32>
    %cst_54 = arith.constant dense<0.000000e+00> : vector<10x1xf32>
    %165 = tpu.matmul %164, %163, %cst_54 {dimension_numbers = #tpu.dot_dimension_numbers<[1], [0], [0], [1], [0, 0, 1, 1], [], []>} : vector<10x32xf32>, vector<32x1xf32>, vector<10x1xf32> -> vector<10x1xf32>
    %c0_55 = arith.constant 0 : index
    %c0_56 = arith.constant 0 : index
    %166 = vector.load %arg12[%c0_55, %c0_56] : memref<10x1xf32, #tpu.memory_space<vmem>>, vector<10x1xf32>
    %167 = arith.addf %165, %166 : vector<10x1xf32>
    %168 = tpu.transpose %167, [1, 0] : vector<10x1xf32> -> vector<1x10xf32>
    %c0_57 = arith.constant 0 : index
    %c0_58 = arith.constant 0 : index
    %c0_59 = arith.constant 0 : index
    %169 = vector.load %arg13[%c0_57, %c0_58, %c0_59] : memref<1x1x10xf32, #tpu.memory_space<vmem>>, vector<1x1x10xf32>
    %170 = vector.shape_cast %169 : vector<1x1x10xf32> to vector<1x10xf32>
    %171 = vector.shape_cast %168 : vector<1x10xf32> to vector<1x1x10xf32>
    tpu.vector_store %arg13[%c0_57, %c0_58, %c0_59], %171 {strides = array<i32>} : memref<1x1x10xf32, #tpu.memory_space<vmem>>, vector<1x1x10xf32>,
    return
  }
  func.func @transform_0(%arg0: i32) -> (i32, i32, i32) {
    %c0_i32 = arith.constant 0 : i32
    %c0_i32_0 = arith.constant 0 : i32
    %c0_i32_1 = arith.constant 0 : i32
    return %arg0, %c0_i32, %c0_i32_0 : i32, i32, i32
  }
  func.func @transform_1(%arg0: i32) -> (i32, i32, i32) {
    %c0_i32 = arith.constant 0 : i32
    %c0_i32_0 = arith.constant 0 : i32
    %c0_i32_1 = arith.constant 0 : i32
    return %arg0, %c0_i32, %c0_i32_0 : i32, i32, i32
  }
  func.func @transform_2(%arg0: i32) -> (i32, i32) {
    %c0_i32 = arith.constant 0 : i32
    %c0_i32_0 = arith.constant 0 : i32
    %c0_i32_1 = arith.constant 0 : i32
    return %c0_i32, %c0_i32_0 : i32, i32
  }
  func.func @transform_3(%arg0: i32) -> (i32, i32) {
    %c0_i32 = arith.constant 0 : i32
    %c0_i32_0 = arith.constant 0 : i32
    %c0_i32_1 = arith.constant 0 : i32
    return %c0_i32, %c0_i32_0 : i32, i32
  }
  func.func @transform_4(%arg0: i32) -> (i32, i32) {
    %c0_i32 = arith.constant 0 : i32
    %c0_i32_0 = arith.constant 0 : i32
    %c0_i32_1 = arith.constant 0 : i32
    return %c0_i32, %c0_i32_0 : i32, i32
  }
  func.func @transform_5(%arg0: i32) -> (i32, i32) {
    %c0_i32 = arith.constant 0 : i32
    %c0_i32_0 = arith.constant 0 : i32
    %c0_i32_1 = arith.constant 0 : i32
    return %c0_i32, %c0_i32_0 : i32, i32
  }
  func.func @transform_6(%arg0: i32) -> (i32, i32, i32) {
    %c0_i32 = arith.constant 0 : i32
    %c0_i32_0 = arith.constant 0 : i32
    %c0_i32_1 = arith.constant 0 : i32
    %c0_i32_2 = arith.constant 0 : i32
    return %c0_i32, %c0_i32_0, %c0_i32_1 : i32, i32, i32
  }
  func.func @transform_7(%arg0: i32) -> (i32, i32, i32) {
    %c0_i32 = arith.constant 0 : i32
    %c0_i32_0 = arith.constant 0 : i32
    %c0_i32_1 = arith.constant 0 : i32
    %c0_i32_2 = arith.constant 0 : i32
    return %c0_i32, %c0_i32_0, %c0_i32_1 : i32, i32, i32
  }
  func.func @transform_8(%arg0: i32) -> (i32, i32) {
    %c0_i32 = arith.constant 0 : i32
    %c0_i32_0 = arith.constant 0 : i32
    %c0_i32_1 = arith.constant 0 : i32
    return %c0_i32, %c0_i32_0 : i32, i32
  }
  func.func @transform_9(%arg0: i32) -> (i32, i32) {
    %c0_i32 = arith.constant 0 : i32
    %c0_i32_0 = arith.constant 0 : i32
    %c0_i32_1 = arith.constant 0 : i32
    return %c0_i32, %c0_i32_0 : i32, i32
  }
  func.func @transform_10(%arg0: i32) -> (i32, i32) {
    %c0_i32 = arith.constant 0 : i32
    %c0_i32_0 = arith.constant 0 : i32
    %c0_i32_1 = arith.constant 0 : i32
    return %c0_i32, %c0_i32_0 : i32, i32
  }
  func.func @transform_11(%arg0: i32) -> (i32, i32) {
    %c0_i32 = arith.constant 0 : i32
    %c0_i32_0 = arith.constant 0 : i32
    %c0_i32_1 = arith.constant 0 : i32
    return %c0_i32, %c0_i32_0 : i32, i32
  }
  func.func @transform_12(%arg0: i32) -> (i32, i32, i32) {
    %c0_i32 = arith.constant 0 : i32
    %c0_i32_0 = arith.constant 0 : i32
    %c0_i32_1 = arith.constant 0 : i32
    return %arg0, %c0_i32, %c0_i32_0 : i32, i32, i32
  }
}

</mosaic_0001>

<llo_original>
// kernel: fbnet_forward.1
$region0: #{fbnet_forward.1}
  #allocation0 [shape = 'u32[]', space=smem, size = 0x4, offset = 0x4, fixed_abs, tag = 'smem constant byte address 0x4 - core index']
  #allocation1 [shape = 'u32[144,128]{1,0:T(1,128)}', space=vmem, size = 0x12000, scoped, tag = 'internal scratch']
  %s0 = inlined_call_operand.vmem [shape: f32[2,8,256], index: 0, kind: input, shape index: {}]
  %s1 = inlined_call_operand.vmem [shape: f32[2,6,256], index: 1, kind: input, shape index: {}]
  %s2 = inlined_call_operand.vmem [shape: f32[9,256], index: 2, kind: input, shape index: {}]
  %s3 = inlined_call_operand.vmem [shape: f32[256,1], index: 3, kind: input, shape index: {}]
  %s4 = inlined_call_operand.vmem [shape: f32[8,72], index: 4, kind: input, shape index: {}]
  %s5 = inlined_call_operand.vmem [shape: f32[8,1], index: 5, kind: input, shape index: {}]
  %s6 = inlined_call_operand.vmem [shape: f32[2,16,72], index: 6, kind: input, shape index: {}]
  %s7 = inlined_call_operand.vmem [shape: f32[2,16,1], index: 7, kind: input, shape index: {}]
  %s8 = inlined_call_operand.vmem [shape: f32[32,8], index: 8, kind: input, shape index: {}]
  %s9 = inlined_call_operand.vmem [shape: f32[32,1], index: 9, kind: input, shape index: {}]
  %s10 = inlined_call_operand.vmem [shape: f32[10,32], index: 10, kind: input, shape index: {}]
  %s11 = inlined_call_operand.vmem [shape: f32[10,1], index: 11, kind: input, shape index: {}]
  %s12 = inlined_call_operand.vmem [shape: f32[2,1,10], index: 12, kind: output, shape index: {}]
  %s13 = sld [smem:[#allocation0]]
  $region81: #{fbnet_forward.1} parent=0
    _
  %s15 = ssub.s32 1, %s13
  %s16 = scalar_select 0, %s15, %s13
  loop: start=0, step=1, limit=4
  $region2: #{fbnet_forward.1} parent=0 // loop_pre_header
    _
  $region3: #{fbnet_forward.1} parent=0 // loop_header
    %s18 = sphi 0, %s22
    %p19 = scmp.ge.s32.totalorder %s18, 4
    %s28 = sphi 0, %s30
    %s31 = sphi 0, %s28
    %s32 = sphi 0, %s31
    %s48 = sphi 0, %s32
    %s54 = sphi 0, %s56
    %s57 = sphi 0, %s54
    %s58 = sphi 0, %s57
    %s74 = sphi 0, %s58
    %s78 = sphi 0, %s78
    %s80 = sphi 0, %s78
    %s81 = sphi 0, %s80
    %s95 = sphi 0, %s81
    %s99 = sphi 0, %s99
    %s101 = sphi 0, %s99
    %s102 = sphi 0, %s101
    %s116 = sphi 0, %s102
    %s120 = sphi 0, %s120
    %s122 = sphi 0, %s120
    %s123 = sphi 0, %s122
    %s137 = sphi 0, %s123
    %s141 = sphi 0, %s141
    %s143 = sphi 0, %s141
    %s144 = sphi 0, %s143
    %s158 = sphi 0, %s144
    %s162 = sphi 0, %s162
    %s164 = sphi 0, %s162
    %s165 = sphi 0, %s164
    %s179 = sphi 0, %s165
    %s183 = sphi 0, %s183
    %s185 = sphi 0, %s183
    %s186 = sphi 0, %s185
    %s200 = sphi 0, %s186
    %s204 = sphi 0, %s204
    %s206 = sphi 0, %s204
    %s207 = sphi 0, %s206
    %s221 = sphi 0, %s207
    %s225 = sphi 0, %s225
    %s227 = sphi 0, %s225
    %s228 = sphi 0, %s227
    %s242 = sphi 0, %s228
    %s246 = sphi 0, %s246
    %s248 = sphi 0, %s246
    %s249 = sphi 0, %s248
    %s263 = sphi 0, %s249
    %s267 = sphi 0, %s267
    %s269 = sphi 0, %s267
    %s270 = sphi 0, %s269
    %s284 = sphi 0, %s270
    %s290 = sphi 0, %s292
    %s293 = sphi 0, %s290
    %s294 = sphi 0, %s293
    %s310 = sphi 0, %s294
  $region4: #{fbnet_forward.1} parent=0 // loop_header_branch
    %21 = sbr.rel (%p19) target = $region8
  $region5: #{fbnet_forward.1} parent=0 // loop_body
    %s23 = ssub.s32 %s18, 1
    %s24 = ssub.s32 %s18, 2
    %s25 = sadd.s32 %s18, 1
    %s26 = ssub.s32 %s18, %s25
    %p27 = scmp.eq.s32.totalorder %s26, 0
    %s29 = sadd.s32 %s28, 1
    %s30 = scalar_select %p27, %s28, %s29
    %p33 = pneg %p27
    %p34 = scmp.eq.s32.totalorder %s18, 1
    %p35 = por %p33, %p34
    %p36 = scmp.ne.s32.totalorder %s28, %s31
    %p37 = scmp.eq.s32.totalorder %s18, 0
    %p38 = por %p36, %p37
    %p39 = scmp.ne.s32.totalorder %s28, %s31
    %p40 = scmp.eq.s32.totalorder %s23, 1
    %p41 = por %p39, %p40
    %p42 = scmp.ne.s32.totalorder %s31, %s32
    %p43 = scmp.eq.s32.totalorder %s23, 0
    %p44 = por %p42, %p43
    %p45 = scmp.ne.s32.totalorder %s31, %s32
    %p46 = scmp.eq.s32.totalorder %s24, 1
    %p47 = por %p45, %p46
    %p49 = scmp.ne.s32.totalorder %s32, %s48
    %p50 = scmp.eq.s32.totalorder %s24, 0
    %p51 = por %p49, %p50
    %s52 = ssub.s32 %s18, %s25
    %p53 = scmp.eq.s32.totalorder %s52, 0
    %s55 = sadd.s32 %s54, 1
    %s56 = scalar_select %p53, %s54, %s55
    %p59 = pneg %p53
    %p60 = scmp.eq.s32.totalorder %s18, 1
    %p61 = por %p59, %p60
    %p62 = scmp.ne.s32.totalorder %s54, %s57
    %p63 = scmp.eq.s32.totalorder %s18, 0
    %p64 = por %p62, %p63
    %p65 = scmp.ne.s32.totalorder %s54, %s57
    %p66 = scmp.eq.s32.totalorder %s23, 1
    %p67 = por %p65, %p66
    %p68 = scmp.ne.s32.totalorder %s57, %s58
    %p69 = scmp.eq.s32.totalorder %s23, 0
    %p70 = por %p68, %p69
    %p71 = scmp.ne.s32.totalorder %s57, %s58
    %p72 = scmp.eq.s32.totalorder %s24, 1
    %p73 = por %p71, %p72
    %p75 = scmp.ne.s32.totalorder %s58, %s74
    %p76 = scmp.eq.s32.totalorder %s24, 0
    %p77 = por %p75, %p76
    %s79 = sadd.s32 %s78, 1
    %p82 = scmp.eq.s32.totalorder %s18, 1
    %p83 = scmp.ne.s32.totalorder %s78, %s80
    %p84 = scmp.eq.s32.totalorder %s18, 0
    %p85 = por %p83, %p84
    %p86 = scmp.ne.s32.totalorder %s78, %s80
    %p87 = scmp.eq.s32.totalorder %s23, 1
    %p88 = por %p86, %p87
    %p89 = scmp.ne.s32.totalorder %s80, %s81
    %p90 = scmp.eq.s32.totalorder %s23, 0
    %p91 = por %p89, %p90
    %p92 = scmp.ne.s32.totalorder %s80, %s81
    %p93 = scmp.eq.s32.totalorder %s24, 1
    %p94 = por %p92, %p93
    %p96 = scmp.ne.s32.totalorder %s81, %s95
    %p97 = scmp.eq.s32.totalorder %s24, 0
    %p98 = por %p96, %p97
    %s100 = sadd.s32 %s99, 1
    %p103 = scmp.eq.s32.totalorder %s18, 1
    %p104 = scmp.ne.s32.totalorder %s99, %s101
    %p105 = scmp.eq.s32.totalorder %s18, 0
    %p106 = por %p104, %p105
    %p107 = scmp.ne.s32.totalorder %s99, %s101
    %p108 = scmp.eq.s32.totalorder %s23, 1
    %p109 = por %p107, %p108
    %p110 = scmp.ne.s32.totalorder %s101, %s102
    %p111 = scmp.eq.s32.totalorder %s23, 0
    %p112 = por %p110, %p111
    %p113 = scmp.ne.s32.totalorder %s101, %s102
    %p114 = scmp.eq.s32.totalorder %s24, 1
    %p115 = por %p113, %p114
    %p117 = scmp.ne.s32.totalorder %s102, %s116
    %p118 = scmp.eq.s32.totalorder %s24, 0
    %p119 = por %p117, %p118
    %s121 = sadd.s32 %s120, 1
    %p124 = scmp.eq.s32.totalorder %s18, 1
    %p125 = scmp.ne.s32.totalorder %s120, %s122
    %p126 = scmp.eq.s32.totalorder %s18, 0
    %p127 = por %p125, %p126
    %p128 = scmp.ne.s32.totalorder %s120, %s122
    %p129 = scmp.eq.s32.totalorder %s23, 1
    %p130 = por %p128, %p129
    %p131 = scmp.ne.s32.totalorder %s122, %s123
    %p132 = scmp.eq.s32.totalorder %s23, 0
    %p133 = por %p131, %p132
    %p134 = scmp.ne.s32.totalorder %s122, %s123
    %p135 = scmp.eq.s32.totalorder %s24, 1
    %p136 = por %p134, %p135
    %p138 = scmp.ne.s32.totalorder %s123, %s137
    %p139 = scmp.eq.s32.totalorder %s24, 0
    %p140 = por %p138, %p139
    %s142 = sadd.s32 %s141, 1
    %p145 = scmp.eq.s32.totalorder %s18, 1
    %p146 = scmp.ne.s32.totalorder %s141, %s143
    %p147 = scmp.eq.s32.totalorder %s18, 0
    %p148 = por %p146, %p147
    %p149 = scmp.ne.s32.totalorder %s141, %s143
    %p150 = scmp.eq.s32.totalorder %s23, 1
    %p151 = por %p149, %p150
    %p152 = scmp.ne.s32.totalorder %s143, %s144
    %p153 = scmp.eq.s32.totalorder %s23, 0
    %p154 = por %p152, %p153
    %p155 = scmp.ne.s32.totalorder %s143, %s144
    %p156 = scmp.eq.s32.totalorder %s24, 1
    %p157 = por %p155, %p156
    %p159 = scmp.ne.s32.totalorder %s144, %s158
    %p160 = scmp.eq.s32.totalorder %s24, 0
    %p161 = por %p159, %p160
    %s163 = sadd.s32 %s162, 1
    %p166 = scmp.eq.s32.totalorder %s18, 1
    %p167 = scmp.ne.s32.totalorder %s162, %s164
    %p168 = scmp.eq.s32.totalorder %s18, 0
    %p169 = por %p167, %p168
    %p170 = scmp.ne.s32.totalorder %s162, %s164
    %p171 = scmp.eq.s32.totalorder %s23, 1
    %p172 = por %p170, %p171
    %p173 = scmp.ne.s32.totalorder %s164, %s165
    %p174 = scmp.eq.s32.totalorder %s23, 0
    %p175 = por %p173, %p174
    %p176 = scmp.ne.s32.totalorder %s164, %s165
    %p177 = scmp.eq.s32.totalorder %s24, 1
    %p178 = por %p176, %p177
    %p180 = scmp.ne.s32.totalorder %s165, %s179
    %p181 = scmp.eq.s32.totalorder %s24, 0
    %p182 = por %p180, %p181
    %s184 = sadd.s32 %s183, 1
    %p187 = scmp.eq.s32.totalorder %s18, 1
    %p188 = scmp.ne.s32.totalorder %s183, %s185
    %p189 = scmp.eq.s32.totalorder %s18, 0
    %p190 = por %p188, %p189
    %p191 = scmp.ne.s32.totalorder %s183, %s185
    %p192 = scmp.eq.s32.totalorder %s23, 1
    %p193 = por %p191, %p192
    %p194 = scmp.ne.s32.totalorder %s185, %s186
    %p195 = scmp.eq.s32.totalorder %s23, 0
    %p196 = por %p194, %p195
    %p197 = scmp.ne.s32.totalorder %s185, %s186
    %p198 = scmp.eq.s32.totalorder %s24, 1
    %p199 = por %p197, %p198
    %p201 = scmp.ne.s32.totalorder %s186, %s200
    %p202 = scmp.eq.s32.totalorder %s24, 0
    %p203 = por %p201, %p202
    %s205 = sadd.s32 %s204, 1
    %p208 = scmp.eq.s32.totalorder %s18, 1
    %p209 = scmp.ne.s32.totalorder %s204, %s206
    %p210 = scmp.eq.s32.totalorder %s18, 0
    %p211 = por %p209, %p210
    %p212 = scmp.ne.s32.totalorder %s204, %s206
    %p213 = scmp.eq.s32.totalorder %s23, 1
    %p214 = por %p212, %p213
    %p215 = scmp.ne.s32.totalorder %s206, %s207
    %p216 = scmp.eq.s32.totalorder %s23, 0
    %p217 = por %p215, %p216
    %p218 = scmp.ne.s32.totalorder %s206, %s207
    %p219 = scmp.eq.s32.totalorder %s24, 1
    %p220 = por %p218, %p219
    %p222 = scmp.ne.s32.totalorder %s207, %s221
    %p223 = scmp.eq.s32.totalorder %s24, 0
    %p224 = por %p222, %p223
    %s226 = sadd.s32 %s225, 1
    %p229 = scmp.eq.s32.totalorder %s18, 1
    %p230 = scmp.ne.s32.totalorder %s225, %s227
    %p231 = scmp.eq.s32.totalorder %s18, 0
    %p232 = por %p230, %p231
    %p233 = scmp.ne.s32.totalorder %s225, %s227
    %p234 = scmp.eq.s32.totalorder %s23, 1
    %p235 = por %p233, %p234
    %p236 = scmp.ne.s32.totalorder %s227, %s228
    %p237 = scmp.eq.s32.totalorder %s23, 0
    %p238 = por %p236, %p237
    %p239 = scmp.ne.s32.totalorder %s227, %s228
    %p240 = scmp.eq.s32.totalorder %s24, 1
    %p241 = por %p239, %p240
    %p243 = scmp.ne.s32.totalorder %s228, %s242
    %p244 = scmp.eq.s32.totalorder %s24, 0
    %p245 = por %p243, %p244
    %s247 = sadd.s32 %s246, 1
    %p250 = scmp.eq.s32.totalorder %s18, 1
    %p251 = scmp.ne.s32.totalorder %s246, %s248
    %p252 = scmp.eq.s32.totalorder %s18, 0
    %p253 = por %p251, %p252
    %p254 = scmp.ne.s32.totalorder %s246, %s248
    %p255 = scmp.eq.s32.totalorder %s23, 1
    %p256 = por %p254, %p255
    %p257 = scmp.ne.s32.totalorder %s248, %s249
    %p258 = scmp.eq.s32.totalorder %s23, 0
    %p259 = por %p257, %p258
    %p260 = scmp.ne.s32.totalorder %s248, %s249
    %p261 = scmp.eq.s32.totalorder %s24, 1
    %p262 = por %p260, %p261
    %p264 = scmp.ne.s32.totalorder %s249, %s263
    %p265 = scmp.eq.s32.totalorder %s24, 0
    %p266 = por %p264, %p265
    %s268 = sadd.s32 %s267, 1
    %p271 = scmp.eq.s32.totalorder %s18, 1
    %p272 = scmp.ne.s32.totalorder %s267, %s269
    %p273 = scmp.eq.s32.totalorder %s18, 0
    %p274 = por %p272, %p273
    %p275 = scmp.ne.s32.totalorder %s267, %s269
    %p276 = scmp.eq.s32.totalorder %s23, 1
    %p277 = por %p275, %p276
    %p278 = scmp.ne.s32.totalorder %s269, %s270
    %p279 = scmp.eq.s32.totalorder %s23, 0
    %p280 = por %p278, %p279
    %p281 = scmp.ne.s32.totalorder %s269, %s270
    %p282 = scmp.eq.s32.totalorder %s24, 1
    %p283 = por %p281, %p282
    %p285 = scmp.ne.s32.totalorder %s270, %s284
    %p286 = scmp.eq.s32.totalorder %s24, 0
    %p287 = por %p285, %p286
    %s288 = ssub.s32 %s18, %s25
    %p289 = scmp.eq.s32.totalorder %s288, 0
    %s291 = sadd.s32 %s290, 1
    %s292 = scalar_select %p289, %s290, %s291
    %p295 = pneg %p289
    %p296 = scmp.eq.s32.totalorder %s18, 1
    %p297 = por %p295, %p296
    %p298 = scmp.ne.s32.totalorder %s290, %s293
    %p299 = scmp.eq.s32.totalorder %s18, 0
    %p300 = por %p298, %p299
    %p301 = scmp.ne.s32.totalorder %s290, %s293
    %p302 = scmp.eq.s32.totalorder %s23, 1
    %p303 = por %p301, %p302
    %p304 = scmp.ne.s32.totalorder %s293, %s294
    %p305 = scmp.eq.s32.totalorder %s23, 0
    %p306 = por %p304, %p305
    %p307 = scmp.ne.s32.totalorder %s293, %s294
    %p308 = scmp.eq.s32.totalorder %s24, 1
    %p309 = por %p307, %p308
    %p311 = scmp.ne.s32.totalorder %s294, %s310
    %p312 = scmp.eq.s32.totalorder %s24, 0
    %p313 = por %p311, %p312
    %p314 = scmp.le.s32.totalorder 1, %s18
    %p315 = scmp.lt.s32.totalorder %s18, 3
    %p316 = pnand %p314, %p315
    %p317 = pneg %p316
    // Predicated region
    $region9: #{fbnet_forward.1} parent=5 // pred_check
      _
    $region10: #{fbnet_forward.1} parent=5 // pred_check_branch
      %319 = sbr.rel (%p316) target = $region12
    $region11: #{fbnet_forward.1} parent=5 // pred_region
      %s320 = ssub.s32 %s18, 1
      // Predicated region
      $region13: #{fbnet_forward.1} parent=11 // pred_check
        %p321 = pneg %p91
      $region14: #{fbnet_forward.1} parent=11 // pred_check_branch
        %323 = sbr.rel (%p321) target = $region16
      $region15: #{fbnet_forward.1} parent=11 // pred_region
        _
      $region16: #{fbnet_forward.1} parent=11 // pred_fallthru
        _
      // Predicated region
      $region17: #{fbnet_forward.1} parent=11 // pred_check
        %p324 = pneg %p112
      $region18: #{fbnet_forward.1} parent=11 // pred_check_branch
        %326 = sbr.rel (%p324) target = $region20
      $region19: #{fbnet_forward.1} parent=11 // pred_region
        _
      $region20: #{fbnet_forward.1} parent=11 // pred_fallthru
        _
      // Predicated region
      $region21: #{fbnet_forward.1} parent=11 // pred_check
        %p327 = pneg %p133
      $region22: #{fbnet_forward.1} parent=11 // pred_check_branch
        %329 = sbr.rel (%p327) target = $region24
      $region23: #{fbnet_forward.1} parent=11 // pred_region
        _
      $region24: #{fbnet_forward.1} parent=11 // pred_fallthru
        _
      // Predicated region
      $region25: #{fbnet_forward.1} parent=11 // pred_check
        %p330 = pneg %p154
      $region26: #{fbnet_forward.1} parent=11 // pred_check_branch
        %332 = sbr.rel (%p330) target = $region28
      $region27: #{fbnet_forward.1} parent=11 // pred_region
        _
      $region28: #{fbnet_forward.1} parent=11 // pred_fallthru
        _
      // Predicated region
      $region29: #{fbnet_forward.1} parent=11 // pred_check
        %p333 = pneg %p175
      $region30: #{fbnet_forward.1} parent=11 // pred_check_branch
        %335 = sbr.rel (%p333) target = $region32
      $region31: #{fbnet_forward.1} parent=11 // pred_region
        _
      $region32: #{fbnet_forward.1} parent=11 // pred_fallthru
        _
      // Predicated region
      $region33: #{fbnet_forward.1} parent=11 // pred_check
        %p336 = pneg %p196
      $region34: #{fbnet_forward.1} parent=11 // pred_check_branch
        %338 = sbr.rel (%p336) target = $region36
      $region35: #{fbnet_forward.1} parent=11 // pred_region
        _
      $region36: #{fbnet_forward.1} parent=11 // pred_fallthru
        _
      // Predicated region
      $region37: #{fbnet_forward.1} parent=11 // pred_check
        %p339 = pneg %p217
      $region38: #{fbnet_forward.1} parent=11 // pred_check_branch
        %341 = sbr.rel (%p339) target = $region40
      $region39: #{fbnet_forward.1} parent=11 // pred_region
        _
      $region40: #{fbnet_forward.1} parent=11 // pred_fallthru
        _
      // Predicated region
      $region41: #{fbnet_forward.1} parent=11 // pred_check
        %p342 = pneg %p238
      $region42: #{fbnet_forward.1} parent=11 // pred_check_branch
        %344 = sbr.rel (%p342) target = $region44
      $region43: #{fbnet_forward.1} parent=11 // pred_region
        _
      $region44: #{fbnet_forward.1} parent=11 // pred_fallthru
        _
      // Predicated region
      $region45: #{fbnet_forward.1} parent=11 // pred_check
        %p345 = pneg %p259
      $region46: #{fbnet_forward.1} parent=11 // pred_check_branch
        %347 = sbr.rel (%p345) target = $region48
      $region47: #{fbnet_forward.1} parent=11 // pred_region
        _
      $region48: #{fbnet_forward.1} parent=11 // pred_fallthru
        _
      // Predicated region
      $region49: #{fbnet_forward.1} parent=11 // pred_check
        %p348 = pneg %p280
      $region50: #{fbnet_forward.1} parent=11 // pred_check_branch
        %350 = sbr.rel (%p348) target = $region52
      $region51: #{fbnet_forward.1} parent=11 // pred_region
        _
      $region52: #{fbnet_forward.1} parent=11 // pred_fallthru
        _
    $region12: #{fbnet_forward.1} parent=5 // pred_fallthru
      _
    %p351 = scmp.lt.s32.totalorder %s18, 2
    // Predicated region
    $region53: #{fbnet_forward.1} parent=5 // pred_check
      %p352 = pneg %p351
    $region54: #{fbnet_forward.1} parent=5 // pred_check_branch
      %354 = sbr.rel (%p352) target = $region56
    $region55: #{fbnet_forward.1} parent=5 // pred_region
      // Predicated region
      $region57: #{fbnet_forward.1} parent=55 // pred_check
        %p355 = pneg %p38
      $region58: #{fbnet_forward.1} parent=55 // pred_check_branch
        %357 = sbr.rel (%p355) target = $region60
      $region59: #{fbnet_forward.1} parent=55 // pred_region
        %p358 = scmp.lt.s32.totalorder %s18, 1
        %s359 = scalar_select %p358, %s18, 1
        %s360 = smul.addr %s359, 2
        %s361 = smul.addr %s360, 8
        %s362 = scalar_lea.vmem %s0, %s361
      $region60: #{fbnet_forward.1} parent=55 // pred_fallthru
        _
      // Predicated region
      $region61: #{fbnet_forward.1} parent=55 // pred_check
        %p363 = pneg %p64
      $region62: #{fbnet_forward.1} parent=55 // pred_check_branch
        %365 = sbr.rel (%p363) target = $region64
      $region63: #{fbnet_forward.1} parent=55 // pred_region
        %p366 = scmp.lt.s32.totalorder %s18, 1
        %s367 = scalar_select %p366, %s18, 1
        %s368 = smul.addr %s367, 2
        %s369 = smul.addr %s368, 8
        %s370 = scalar_lea.vmem %s1, %s369
      $region64: #{fbnet_forward.1} parent=55 // pred_fallthru
        _
    $region56: #{fbnet_forward.1} parent=5 // pred_fallthru
      _
    %p371 = scmp.le.s32.totalorder 1, %s18
    %p372 = scmp.lt.s32.totalorder %s18, 3
    %p373 = pnand %p371, %p372
    %p374 = pneg %p373
    // Predicated region
    $region65: #{fbnet_forward.1} parent=5 // pred_check
      _
    $region66: #{fbnet_forward.1} parent=5 // pred_check_branch
      %376 = sbr.rel (%p373) target = $region68
    $region67: #{fbnet_forward.1} parent=5 // pred_region
      %s377 = ssub.s32 %s18, 1
      %p378 = scmp.lt.s32.totalorder %s23, 1
      %s379 = scalar_select %p378, %s23, 1
      %s380 = smul.addr %s379, 2
      %s381 = smul.addr %s380, 8
      %s382 = scalar_lea.vmem %s0, %s381
      %p383 = pneg %p44
      %p384 = pneg %p41
      %p385 = scmp.lt.s32.totalorder %s23, 1
      %s386 = scalar_select %p385, %s23, 1
      %s387 = smul.addr %s386, 2
      %s388 = smul.addr %s387, 8
      %s389 = scalar_lea.vmem %s1, %s388
      %p390 = pneg %p70
      %p391 = pneg %p67
      %p392 = pneg %p91
      %p393 = pneg %p88
      %p394 = pneg %p112
      %p395 = pneg %p109
      %p396 = pneg %p133
      %p397 = pneg %p130
      %p398 = pneg %p154
      %p399 = pneg %p151
      %p400 = pneg %p175
      %p401 = pneg %p172
      %p402 = pneg %p196
      %p403 = pneg %p193
      %p404 = pneg %p217
      %p405 = pneg %p214
      %p406 = pneg %p238
      %p407 = pneg %p235
      %p408 = pneg %p259
      %p409 = pneg %p256
      %p410 = pneg %p280
      %p411 = pneg %p277
      %p412 = pneg %p306
      %p413 = pneg %p303
      %p414 = scmp.lt.s32.totalorder %s23, 1
      %s415 = scalar_select %p414, %s23, 1
      %s416 = scalar_lea.vmem %s12, %s415
      %p417 = scmp.lt.s32.totalorder %s23, 1
      %s418 = scalar_select %p417, %s23, 1
      %s419 = smul.addr %s418, 2
      %s420 = smul.addr %s419, 8
      %s421 = scalar_lea.vmem %s0, %s420
      %p422 = scmp.lt.s32.totalorder %s23, 1
      %s423 = scalar_select %p422, %s23, 1
      %s424 = smul.addr %s423, 2
      %s425 = smul.addr %s424, 8
      %s426 = scalar_lea.vmem %s1, %s425
      %p427 = scmp.lt.s32.totalorder %s23, 1
      %s428 = scalar_select %p427, %s23, 1
      %s429 = scalar_lea.vmem %s12, %s428
      %v430 = vld [vmem:[%s421] sm:$0xff]
      %v431 = vld [vmem:[%s421 + $0x8] sm:$0xff]
      %v432 = vld [vmem:[%s2] sm:$0xff]
      %v433 = vld [vmem:[%s2 + $0x8] sm:$0xff]
      %v434 = vld [vmem:[%s2 + $0x10] sm:$0x1]
      %v435 = vld [vmem:[%s2 + $0x18] sm:$0x1]
      %v436 = vld [vmem:[%s426] sm:$0x3f]
      %v437 = vld [vmem:[%s426 + $0x8] sm:$0x3f]
      %v438 = vld [vmem:[%s4] sm:$0xff]
      %439 = vrot.lane.b32.xlu0 %v430, 17
      %v440 = vpop.permute.xlu0 %439
      %441 = vrot.lane.b32.xlu0 %v431, 17
      %v442 = vpop.permute.xlu0 %441
      %v443 = vlaneseq
      %v444 = vand.u32 %v443, 127
      %vm445 = vcmp.lt.s32.totalorder %v444, 17
      %v446 = vsel %vm445, %v440, %v442
      %v447 = vsel %vm445, %v442, %v440
      %v448 = vlaneseq
      %v449 = vshrl.u32 %v448, 7
      %v450 = vsub.s32 0, %v449
      %v451 = vrot.slane %v432, %v450
      %v452 = vlaneseq
      %v453 = vshrl.u32 %v452, 7
      %v454 = vsub.s32 0, %v453
      %v455 = vrot.slane %v433, %v454
      %v456 = vmul.f32 %v447, %v451
      %v457 = vmul.f32 %v446, %v455
      %458 = vrot.lane.b32.xlu0 %v430, 16
      %v459 = vpop.permute.xlu0 %458
      %460 = vrot.lane.b32.xlu0 %v431, 16
      %v461 = vpop.permute.xlu0 %460
      %vm462 = vcmp.lt.s32.totalorder %v444, 16
      %v463 = vsel %vm462, %v459, %v461
      %v464 = vsel %vm462, %v461, %v459
      %v465 = vlaneseq
      %v466 = vshrl.u32 %v465, 7
      %v467 = vsub.s32 1, %v466
      %v468 = vrot.slane %v432, %v467
      %v469 = vlaneseq
      %v470 = vshrl.u32 %v469, 7
      %v471 = vsub.s32 1, %v470
      %v472 = vrot.slane %v433, %v471
      %v473 = vmul.f32 %v464, %v468
      %v474 = vmul.f32 %v463, %v472
      %475 = vrot.lane.b32.xlu0 %v430, 15
      %v476 = vpop.permute.xlu0 %475
      %477 = vrot.lane.b32.xlu0 %v431, 15
      %v478 = vpop.permute.xlu0 %477
      %vm479 = vcmp.lt.s32.totalorder %v444, 15
      %v480 = vsel %vm479, %v476, %v478
      %v481 = vsel %vm479, %v478, %v476
      %v482 = vlaneseq
      %v483 = vshrl.u32 %v482, 7
      %v484 = vsub.s32 2, %v483
      %v485 = vrot.slane %v432, %v484
      %v486 = vlaneseq
      %v487 = vshrl.u32 %v486, 7
      %v488 = vsub.s32 2, %v487
      %v489 = vrot.slane %v433, %v488
      %v490 = vmul.f32 %v481, %v485
      %v491 = vmul.f32 %v480, %v489
      %492 = vrot.lane.b32.xlu0 %v430, 1
      %v493 = vpop.permute.xlu0 %492
      %494 = vrot.lane.b32.xlu0 %v431, 1
      %v495 = vpop.permute.xlu0 %494
      %vm496 = vcmp.lt.s32.totalorder %v444, 1
      %v497 = vsel %vm496, %v493, %v495
      %v498 = vsel %vm496, %v495, %v493
      %v499 = vlaneseq
      %v500 = vshrl.u32 %v499, 7
      %v501 = vsub.s32 3, %v500
      %v502 = vrot.slane %v432, %v501
      %v503 = vlaneseq
      %v504 = vshrl.u32 %v503, 7
      %v505 = vsub.s32 3, %v504
      %v506 = vrot.slane %v433, %v505
      %v507 = vmul.f32 %v498, %v502
      %v508 = vmul.f32 %v497, %v506
      %509 = vrot.lane.b32.xlu0 %v430, 127
      %v510 = vpop.permute.xlu0 %509
      %511 = vrot.lane.b32.xlu0 %v431, 127
      %v512 = vpop.permute.xlu0 %511
      %vm513 = vcmp.lt.s32.totalorder %v444, 127
      %v514 = vsel %vm513, %v510, %v512
      %v515 = vsel %vm513, %v512, %v510
      %v516 = vlaneseq
      %v517 = vshrl.u32 %v516, 7
      %v518 = vsub.s32 5, %v517
      %v519 = vrot.slane %v432, %v518
      %v520 = vlaneseq
      %v521 = vshrl.u32 %v520, 7
      %v522 = vsub.s32 5, %v521
      %v523 = vrot.slane %v433, %v522
      %v524 = vmul.f32 %v514, %v519
      %v525 = vmul.f32 %v515, %v523
      %526 = vrot.lane.b32.xlu0 %v430, 113
      %v527 = vpop.permute.xlu0 %526
      %528 = vrot.lane.b32.xlu0 %v431, 113
      %v529 = vpop.permute.xlu0 %528
      %vm530 = vcmp.lt.s32.totalorder %v444, 113
      %v531 = vsel %vm530, %v527, %v529
      %v532 = vsel %vm530, %v529, %v527
      %v533 = vlaneseq
      %v534 = vshrl.u32 %v533, 7
      %v535 = vsub.s32 6, %v534
      %v536 = vrot.slane %v432, %v535
      %v537 = vlaneseq
      %v538 = vshrl.u32 %v537, 7
      %v539 = vsub.s32 6, %v538
      %v540 = vrot.slane %v433, %v539
      %v541 = vmul.f32 %v531, %v536
      %v542 = vmul.f32 %v532, %v540
      %543 = vrot.lane.b32.xlu0 %v430, 112
      %v544 = vpop.permute.xlu0 %543
      %545 = vrot.lane.b32.xlu0 %v431, 112
      %v546 = vpop.permute.xlu0 %545
      %vm547 = vcmp.lt.s32.totalorder %v444, 112
      %v548 = vsel %vm547, %v544, %v546
      %v549 = vsel %vm547, %v546, %v544
      %v550 = vlaneseq
      %v551 = vshrl.u32 %v550, 7
      %v552 = vsub.s32 7, %v551
      %v553 = vrot.slane %v432, %v552
      %v554 = vlaneseq
      %v555 = vshrl.u32 %v554, 7
      %v556 = vsub.s32 7, %v555
      %v557 = vrot.slane %v433, %v556
      %v558 = vmul.f32 %v548, %v553
      %v559 = vmul.f32 %v549, %v557
      %560 = vrot.lane.b32.xlu0 %v430, 111
      %v561 = vpop.permute.xlu0 %560
      %562 = vrot.lane.b32.xlu0 %v431, 111
      %v563 = vpop.permute.xlu0 %562
      %vm564 = vcmp.lt.s32.totalorder %v444, 111
      %v565 = vsel %vm564, %v561, %v563
      %v566 = vsel %vm564, %v563, %v561
      %v567 = vlaneseq
      %v568 = vshrl.u32 %v567, 7
      %v569 = vsub.s32 0, %v568
      %v570 = vrot.slane %v434, %v569
      %v571 = vlaneseq
      %v572 = vshrl.u32 %v571, 7
      %v573 = vsub.s32 0, %v572
      %v574 = vrot.slane %v435, %v573
      %v575 = vmul.f32 %v565, %v570
      %v576 = vmul.f32 %v566, %v574
      %v577 = vld [vmem:[%s5] sm:$0xff]
      %579 = vset.pattern.permute.xlu0 0
      %580 = vperm.xlu0 %579, %v577
      %v581 = vpop.permute.xlu0 %580
      %vm583 = vcmask 588800
      %v585 = vsel %vm583, %v438, 0
      %587 = vmatprep.subr.mxu0 0.0
      %588 = vmatpush1.msra.mxu0 0.0
      %589 = vmatprep.subr.mxu0 0.0
      %590 = vmatpush1.msra.mxu0 0.0
      %591 = vmatprep.subr.mxu0 0.0
      %592 = vmatpush1.msra.mxu0 0.0
      %593 = vmatprep.subr.mxu0 0.0
      %594 = vmatpush1.msra.mxu0 0.0
      %595 = vmatprep.subr.mxu0 0.0
      %596 = vmatpush1.msra.mxu0 0.0
      %597 = vmatprep.subr.mxu0 0.0
      %598 = vmatpush1.msra.mxu0 0.0
      %599 = vmatprep.subr.mxu0 0.0
      %600 = vmatpush1.msra.mxu0 0.0
      %601 = vmatprep.subr.mxu0 %v576
      %602 = vmatpush1.msra.mxu0 %v575
      %603 = vmatprep.subr.mxu0 %v559
      %604 = vmatpush1.msra.mxu0 %v558
      %605 = vmatprep.subr.mxu0 %v542
      %606 = vmatpush1.msra.mxu0 %v541
      %607 = vmatprep.subr.mxu0 %v525
      %608 = vmatpush1.msra.mxu0 %v524
      %609 = vmatprep.subr.mxu0 %v431
      %610 = vmatpush1.msra.mxu0 %v430
      %611 = vmatprep.subr.mxu0 %v508
      %612 = vmatpush1.msra.mxu0 %v507
      %613 = vmatprep.subr.mxu0 %v491
      %614 = vmatpush1.msra.mxu0 %v490
      %615 = vmatprep.subr.mxu0 %v474
      %616 = vmatpush1.msra.mxu0 %v473
      %617 = vmatprep.subr.mxu0 %v457
      %618 = vmatpush1.msra.mxu0 %v456
      %619 = vmatprep.subr.mxu0 0.0
      %620 = vmatpush2.msra.mxu0 0.0
      %621 = vmatprep.subr.mxu0 0.0
      %622 = vmatpush2.msra.mxu0 0.0
      %623 = vmatprep.subr.mxu0 0.0
      %624 = vmatpush2.msra.mxu0 0.0
      %625 = vmatprep.subr.mxu0 0.0
      %626 = vmatpush2.msra.mxu0 0.0
      %627 = vmatprep.subr.mxu0 0.0
      %628 = vmatpush2.msra.mxu0 0.0
      %629 = vmatprep.subr.mxu0 0.0
      %630 = vmatpush2.msra.mxu0 0.0
      %631 = vmatprep.subr.mxu0 0.0
      %632 = vmatpush2.msra.mxu0 0.0
      %633 = vmatprep.subr.mxu0 0.0
      %634 = vmatpush2.msra.mxu0 0.0
      %635 = vmatprep.subr.mxu0 0.0
      %636 = vmatpush2.msra.mxu0 0.0
      %637 = vmatprep.subr.mxu0 0.0
      %638 = vmatpush2.msra.mxu0 0.0
      %639 = vmatprep.subr.mxu0 0.0
      %640 = vmatpush2.msra.mxu0 0.0
      %641 = vmatprep.subr.mxu0 0.0
      %642 = vmatpush2.msra.mxu0 0.0
      %643 = vmatprep.subr.mxu0 0.0
      %644 = vmatpush2.msra.mxu0 0.0
      %645 = vmatprep.subr.mxu0 0.0
      %646 = vmatpush2.msra.mxu0 0.0
      %647 = vmatprep.subr.mxu0 0.0
      %648 = vmatpush2.msra.mxu0 0.0
      %649 = vmatprep.subr.mxu0 0.0
      %650 = vmatpush2.msra.mxu0 0.0
      %651 = vmatprep.mubr.f32.mxu0 0.0
      %652 = vmatmul.mubr.f32.gmra.mxu0 %v585
      %v653 = vpop.f32.mrf.mxu0
      %v654 = vadd.f32 %v581, %v653
      %v655 = vpop.f32.mrf.mxu0
      %v656 = vadd.f32 %v581, %v655
      %657 = vdwg.mxu0
      %v658 = vmax.f32 %v654, 0.0
      %v659 = vmax.f32 %v656, 0.0
      %v660 = vld [vmem:[%s6] sm:$0xff]
      %v661 = vld [vmem:[%s6 + $0x8] sm:$0xff]
      %662 = vrot.lane.b32.xlu0 %v658, 17
      %v663 = vpop.permute.xlu0 %662
      %664 = vrot.lane.b32.xlu0 %v659, 17
      %v665 = vpop.permute.xlu0 %664
      %v666 = vsel %vm445, %v663, %v665
      %v667 = vsel %vm445, %v665, %v663
      %v668 = vmul.f32 %v667, %v451
      %v669 = vmul.f32 %v666, %v455
      %670 = vrot.lane.b32.xlu0 %v658, 16
      %v671 = vpop.permute.xlu0 %670
      %672 = vrot.lane.b32.xlu0 %v659, 16
      %v673 = vpop.permute.xlu0 %672
      %v674 = vsel %vm462, %v671, %v673
      %v675 = vsel %vm462, %v673, %v671
      %v676 = vmul.f32 %v675, %v468
      %v677 = vmul.f32 %v674, %v472
      %678 = vrot.lane.b32.xlu0 %v658, 15
      %v679 = vpop.permute.xlu0 %678
      %680 = vrot.lane.b32.xlu0 %v659, 15
      %v681 = vpop.permute.xlu0 %680
      %v682 = vsel %vm479, %v679, %v681
      %v683 = vsel %vm479, %v681, %v679
      %v684 = vmul.f32 %v683, %v485
      %v685 = vmul.f32 %v682, %v489
      %686 = vrot.lane.b32.xlu0 %v658, 1
      %v687 = vpop.permute.xlu0 %686
      %688 = vrot.lane.b32.xlu0 %v659, 1
      %v689 = vpop.permute.xlu0 %688
      %v690 = vsel %vm496, %v687, %v689
      %v691 = vsel %vm496, %v689, %v687
      %v692 = vmul.f32 %v691, %v502
      %v693 = vmul.f32 %v690, %v506
      %694 = vrot.lane.b32.xlu0 %v658, 127
      %v695 = vpop.permute.xlu0 %694
      %696 = vrot.lane.b32.xlu0 %v659, 127
      %v697 = vpop.permute.xlu0 %696
      %v698 = vsel %vm513, %v695, %v697
      %v699 = vsel %vm513, %v697, %v695
      %v700 = vmul.f32 %v698, %v519
      %v701 = vmul.f32 %v699, %v523
      %702 = vrot.lane.b32.xlu0 %v658, 113
      %v703 = vpop.permute.xlu0 %702
      %704 = vrot.lane.b32.xlu0 %v659, 113
      %v705 = vpop.permute.xlu0 %704
      %v706 = vsel %vm530, %v703, %v705
      %v707 = vsel %vm530, %v705, %v703
      %v708 = vmul.f32 %v706, %v536
      %v709 = vmul.f32 %v707, %v540
      %710 = vrot.lane.b32.xlu0 %v658, 112
      %v711 = vpop.permute.xlu0 %710
      %712 = vrot.lane.b32.xlu0 %v659, 112
      %v713 = vpop.permute.xlu0 %712
      %v714 = vsel %vm547, %v711, %v713
      %v715 = vsel %vm547, %v713, %v711
      %v716 = vmul.f32 %v714, %v553
      %v717 = vmul.f32 %v715, %v557
      %718 = vrot.lane.b32.xlu0 %v658, 111
      %v719 = vpop.permute.xlu0 %718
      %720 = vrot.lane.b32.xlu0 %v659, 111
      %v721 = vpop.permute.xlu0 %720
      %v722 = vsel %vm564, %v719, %v721
      %v723 = vsel %vm564, %v721, %v719
      %v724 = vmul.f32 %v722, %v570
      %v725 = vmul.f32 %v723, %v574
      %v726 = vld [vmem:[%s7] sm:$0xff]
      %v727 = vld [vmem:[%s7 + $0x8] sm:$0xff]
      %729 = vset.pattern.permute.xlu0 0
      %730 = vperm.xlu0 %729, %v726
      %v731 = vpop.permute.xlu0 %730
      %734 = vset.pattern.permute.xlu0 0
      %735 = vperm.xlu0 %734, %v727
      %v736 = vpop.permute.xlu0 %735
      %v739 = vsel %vm583, %v660, 0
      %v742 = vsel %vm583, %v661, 0
      %744 = vmatprep.subr.mxu0 0.0
      %745 = vmatpush1.msra.mxu0 0.0
      %746 = vmatprep.subr.mxu0 0.0
      %747 = vmatpush1.msra.mxu0 0.0
      %748 = vmatprep.subr.mxu0 0.0
      %749 = vmatpush1.msra.mxu0 0.0
      %750 = vmatprep.subr.mxu0 0.0
      %751 = vmatpush1.msra.mxu0 0.0
      %752 = vmatprep.subr.mxu0 0.0
      %753 = vmatpush1.msra.mxu0 0.0
      %754 = vmatprep.subr.mxu0 0.0
      %755 = vmatpush1.msra.mxu0 0.0
      %756 = vmatprep.subr.mxu0 0.0
      %757 = vmatpush1.msra.mxu0 0.0
      %758 = vmatprep.subr.mxu0 %v725
      %759 = vmatpush1.msra.mxu0 %v724
      %760 = vmatprep.subr.mxu0 %v717
      %761 = vmatpush1.msra.mxu0 %v716
      %762 = vmatprep.subr.mxu0 %v709
      %763 = vmatpush1.msra.mxu0 %v708
      %764 = vmatprep.subr.mxu0 %v701
      %765 = vmatpush1.msra.mxu0 %v700
      %766 = vmatprep.subr.mxu0 %v659
      %767 = vmatpush1.msra.mxu0 %v658
      %768 = vmatprep.subr.mxu0 %v693
      %769 = vmatpush1.msra.mxu0 %v692
      %770 = vmatprep.subr.mxu0 %v685
      %771 = vmatpush1.msra.mxu0 %v684
      %772 = vmatprep.subr.mxu0 %v677
      %773 = vmatpush1.msra.mxu0 %v676
      %774 = vmatprep.subr.mxu0 %v669
      %775 = vmatpush1.msra.mxu0 %v668
      %776 = vmatprep.subr.mxu0 0.0
      %777 = vmatpush2.msra.mxu0 0.0
      %778 = vmatprep.subr.mxu0 0.0
      %779 = vmatpush2.msra.mxu0 0.0
      %780 = vmatprep.subr.mxu0 0.0
      %781 = vmatpush2.msra.mxu0 0.0
      %782 = vmatprep.subr.mxu0 0.0
      %783 = vmatpush2.msra.mxu0 0.0
      %784 = vmatprep.subr.mxu0 0.0
      %785 = vmatpush2.msra.mxu0 0.0
      %786 = vmatprep.subr.mxu0 0.0
      %787 = vmatpush2.msra.mxu0 0.0
      %788 = vmatprep.subr.mxu0 0.0
      %789 = vmatpush2.msra.mxu0 0.0
      %790 = vmatprep.subr.mxu0 0.0
      %791 = vmatpush2.msra.mxu0 0.0
      %792 = vmatprep.subr.mxu0 0.0
      %793 = vmatpush2.msra.mxu0 0.0
      %794 = vmatprep.subr.mxu0 0.0
      %795 = vmatpush2.msra.mxu0 0.0
      %796 = vmatprep.subr.mxu0 0.0
      %797 = vmatpush2.msra.mxu0 0.0
      %798 = vmatprep.subr.mxu0 0.0
      %799 = vmatpush2.msra.mxu0 0.0
      %800 = vmatprep.subr.mxu0 0.0
      %801 = vmatpush2.msra.mxu0 0.0
      %802 = vmatprep.subr.mxu0 0.0
      %803 = vmatpush2.msra.mxu0 0.0
      %804 = vmatprep.subr.mxu0 0.0
      %805 = vmatpush2.msra.mxu0 0.0
      %806 = vmatprep.subr.mxu0 0.0
      %807 = vmatpush2.msra.mxu0 0.0
      %808 = vmatprep.mubr.f32.mxu0 0.0
      %809 = vmatmul.mubr.f32.gmra.mxu0 %v739
      %v810 = vpop.f32.mrf.mxu0
      %v811 = vadd.f32 %v731, %v810
      %v812 = vpop.f32.mrf.mxu0
      %v813 = vadd.f32 %v731, %v812
      %814 = vmatprep.mubr.f32.mxu0 0.0
      %815 = vmatmul.mubr.f32.gmra.mxu0 %v742
      %v816 = vpop.f32.mrf.mxu0
      %v817 = vadd.f32 %v736, %v816
      %v818 = vpop.f32.mrf.mxu0
      %v819 = vadd.f32 %v736, %v818
      %820 = vdwg.mxu0
      %v821 = vmax.f32 %v811, 0.0
      %v822 = vmax.f32 %v813, 0.0
      %v823 = vmax.f32 %v817, 0.0
      %v824 = vmax.f32 %v819, 0.0
      %v825 = vlaneseq
      %v826 = vshrl.u32 %v825, 7
      %v827 = vsub.s32 0, %v826
      %v828 = vrot.slane %v436, %v827
      %v829 = vlaneseq
      %v830 = vshrl.u32 %v829, 7
      %v831 = vsub.s32 0, %v830
      %v832 = vrot.slane %v437, %v831
      %v833 = vmul.f32 %v828, %v821
      %v834 = vmul.f32 %v832, %v822
      %v835 = vlaneseq
      %v836 = vshrl.u32 %v835, 7
      %v837 = vsub.s32 1, %v836
      %v838 = vrot.slane %v436, %v837
      %v839 = vlaneseq
      %v840 = vshrl.u32 %v839, 7
      %v841 = vsub.s32 1, %v840
      %v842 = vrot.slane %v437, %v841
      %v843 = vmul.f32 %v838, %v823
      %v844 = vmul.f32 %v842, %v824
      %v845 = vadd.f32 %v833, %v843
      %v846 = vadd.f32 %v834, %v844
      %v847 = vlaneseq
      %v848 = vshrl.u32 %v847, 7
      %v849 = vsub.s32 2, %v848
      %v850 = vrot.slane %v436, %v849
      %v851 = vlaneseq
      %v852 = vshrl.u32 %v851, 7
      %v853 = vsub.s32 2, %v852
      %v854 = vrot.slane %v437, %v853
      %v855 = vmul.f32 %v850, %v658
      %v856 = vmul.f32 %v854, %v659
      %v857 = vadd.f32 %v845, %v855
      %v858 = vadd.f32 %v846, %v856
      %s859 = scalar_lea.vmem %s6, 16
      %v860 = vld [vmem:[%s859] sm:$0xff]
      %v861 = vld [vmem:[%s859 + $0x8] sm:$0xff]
      %862 = vrot.lane.b32.xlu0 %v857, 17
      %v863 = vpop.permute.xlu0 %862
      %864 = vrot.lane.b32.xlu0 %v858, 17
      %v865 = vpop.permute.xlu0 %864
      %v866 = vsel %vm445, %v863, %v865
      %v867 = vsel %vm445, %v865, %v863
      %v868 = vmul.f32 %v867, %v451
      %v869 = vmul.f32 %v866, %v455
      %870 = vrot.lane.b32.xlu0 %v857, 16
      %v871 = vpop.permute.xlu0 %870
      %872 = vrot.lane.b32.xlu0 %v858, 16
      %v873 = vpop.permute.xlu0 %872
      %v874 = vsel %vm462, %v871, %v873
      %v875 = vsel %vm462, %v873, %v871
      %v876 = vmul.f32 %v875, %v468
      %v877 = vmul.f32 %v874, %v472
      %878 = vrot.lane.b32.xlu0 %v857, 15
      %v879 = vpop.permute.xlu0 %878
      %880 = vrot.lane.b32.xlu0 %v858, 15
      %v881 = vpop.permute.xlu0 %880
      %v882 = vsel %vm479, %v879, %v881
      %v883 = vsel %vm479, %v881, %v879
      %v884 = vmul.f32 %v883, %v485
      %v885 = vmul.f32 %v882, %v489
      %886 = vrot.lane.b32.xlu0 %v857, 1
      %v887 = vpop.permute.xlu0 %886
      %888 = vrot.lane.b32.xlu0 %v858, 1
      %v889 = vpop.permute.xlu0 %888
      %v890 = vsel %vm496, %v887, %v889
      %v891 = vsel %vm496, %v889, %v887
      %v892 = vmul.f32 %v891, %v502
      %v893 = vmul.f32 %v890, %v506
      %894 = vrot.lane.b32.xlu0 %v857, 127
      %v895 = vpop.permute.xlu0 %894
      %896 = vrot.lane.b32.xlu0 %v858, 127
      %v897 = vpop.permute.xlu0 %896
      %v898 = vsel %vm513, %v895, %v897
      %v899 = vsel %vm513, %v897, %v895
      %v900 = vmul.f32 %v898, %v519
      %v901 = vmul.f32 %v899, %v523
      %902 = vrot.lane.b32.xlu0 %v857, 113
      %v903 = vpop.permute.xlu0 %902
      %904 = vrot.lane.b32.xlu0 %v858, 113
      %v905 = vpop.permute.xlu0 %904
      %v906 = vsel %vm530, %v903, %v905
      %v907 = vsel %vm530, %v905, %v903
      %v908 = vmul.f32 %v906, %v536
      %v909 = vmul.f32 %v907, %v540
      %910 = vrot.lane.b32.xlu0 %v857, 112
      %v911 = vpop.permute.xlu0 %910
      %912 = vrot.lane.b32.xlu0 %v858, 112
      %v913 = vpop.permute.xlu0 %912
      %v914 = vsel %vm547, %v911, %v913
      %v915 = vsel %vm547, %v913, %v911
      %v916 = vmul.f32 %v914, %v553
      %v917 = vmul.f32 %v915, %v557
      %918 = vrot.lane.b32.xlu0 %v857, 111
      %v919 = vpop.permute.xlu0 %918
      %920 = vrot.lane.b32.xlu0 %v858, 111
      %v921 = vpop.permute.xlu0 %920
      %v922 = vsel %vm564, %v919, %v921
      %v923 = vsel %vm564, %v921, %v919
      %v924 = vmul.f32 %v922, %v570
      %v925 = vmul.f32 %v923, %v574
      %s926 = scalar_lea.vmem %s7, 16
      %v927 = vld [vmem:[%s926] sm:$0xff]
      %v928 = vld [vmem:[%s926 + $0x8] sm:$0xff]
      %930 = vset.pattern.permute.xlu0 0
      %931 = vperm.xlu0 %930, %v927
      %v932 = vpop.permute.xlu0 %931
      %935 = vset.pattern.permute.xlu0 0
      %936 = vperm.xlu0 %935, %v928
      %v937 = vpop.permute.xlu0 %936
      %v940 = vsel %vm583, %v860, 0
      %v943 = vsel %vm583, %v861, 0
      %945 = vmatprep.subr.mxu0 0.0
      %946 = vmatpush1.msra.mxu0 0.0
      %947 = vmatprep.subr.mxu0 0.0
      %948 = vmatpush1.msra.mxu0 0.0
      %949 = vmatprep.subr.mxu0 0.0
      %950 = vmatpush1.msra.mxu0 0.0
      %951 = vmatprep.subr.mxu0 0.0
      %952 = vmatpush1.msra.mxu0 0.0
      %953 = vmatprep.subr.mxu0 0.0
      %954 = vmatpush1.msra.mxu0 0.0
      %955 = vmatprep.subr.mxu0 0.0
      %956 = vmatpush1.msra.mxu0 0.0
      %957 = vmatprep.subr.mxu0 0.0
      %958 = vmatpush1.msra.mxu0 0.0
      %959 = vmatprep.subr.mxu0 %v925
      %960 = vmatpush1.msra.mxu0 %v924
      %961 = vmatprep.subr.mxu0 %v917
      %962 = vmatpush1.msra.mxu0 %v916
      %963 = vmatprep.subr.mxu0 %v909
      %964 = vmatpush1.msra.mxu0 %v908
      %965 = vmatprep.subr.mxu0 %v901
      %966 = vmatpush1.msra.mxu0 %v900
      %967 = vmatprep.subr.mxu0 %v858
      %968 = vmatpush1.msra.mxu0 %v857
      %969 = vmatprep.subr.mxu0 %v893
      %970 = vmatpush1.msra.mxu0 %v892
      %971 = vmatprep.subr.mxu0 %v885
      %972 = vmatpush1.msra.mxu0 %v884
      %973 = vmatprep.subr.mxu0 %v877
      %974 = vmatpush1.msra.mxu0 %v876
      %975 = vmatprep.subr.mxu0 %v869
      %976 = vmatpush1.msra.mxu0 %v868
      %977 = vmatprep.subr.mxu0 0.0
      %978 = vmatpush2.msra.mxu0 0.0
      %979 = vmatprep.subr.mxu0 0.0
      %980 = vmatpush2.msra.mxu0 0.0
      %981 = vmatprep.subr.mxu0 0.0
      %982 = vmatpush2.msra.mxu0 0.0
      %983 = vmatprep.subr.mxu0 0.0
      %984 = vmatpush2.msra.mxu0 0.0
      %985 = vmatprep.subr.mxu0 0.0
      %986 = vmatpush2.msra.mxu0 0.0
      %987 = vmatprep.subr.mxu0 0.0
      %988 = vmatpush2.msra.mxu0 0.0
      %989 = vmatprep.subr.mxu0 0.0
      %990 = vmatpush2.msra.mxu0 0.0
      %991 = vmatprep.subr.mxu0 0.0
      %992 = vmatpush2.msra.mxu0 0.0
      %993 = vmatprep.subr.mxu0 0.0
      %994 = vmatpush2.msra.mxu0 0.0
      %995 = vmatprep.subr.mxu0 0.0
      %996 = vmatpush2.msra.mxu0 0.0
      %997 = vmatprep.subr.mxu0 0.0
      %998 = vmatpush2.msra.mxu0 0.0
      %999 = vmatprep.subr.mxu0 0.0
      %1000 = vmatpush2.msra.mxu0 0.0
      %1001 = vmatprep.subr.mxu0 0.0
      %1002 = vmatpush2.msra.mxu0 0.0
      %1003 = vmatprep.subr.mxu0 0.0
      %1004 = vmatpush2.msra.mxu0 0.0
      %1005 = vmatprep.subr.mxu0 0.0
      %1006 = vmatpush2.msra.mxu0 0.0
      %1007 = vmatprep.subr.mxu0 0.0
      %1008 = vmatpush2.msra.mxu0 0.0
      %1009 = vmatprep.mubr.f32.mxu0 0.0
      %1010 = vmatmul.mubr.f32.gmra.mxu0 %v940
      %v1011 = vpop.f32.mrf.mxu0
      %v1012 = vadd.f32 %v932, %v1011
      %v1013 = vpop.f32.mrf.mxu0
      %v1014 = vadd.f32 %v932, %v1013
      %1015 = vmatprep.mubr.f32.mxu0 0.0
      %1016 = vmatmul.mubr.f32.gmra.mxu0 %v943
      %v1017 = vpop.f32.mrf.mxu0
      %v1018 = vadd.f32 %v937, %v1017
      %v1019 = vpop.f32.mrf.mxu0
      %v1020 = vadd.f32 %v937, %v1019
      %1021 = vdwg.mxu0
      %v1022 = vmax.f32 %v1012, 0.0
      %v1023 = vmax.f32 %v1014, 0.0
      %v1024 = vmax.f32 %v1018, 0.0
      %v1025 = vmax.f32 %v1020, 0.0
      %v1026 = vlaneseq
      %v1027 = vshrl.u32 %v1026, 7
      %v1028 = vsub.s32 3, %v1027
      %v1029 = vrot.slane %v436, %v1028
      %v1030 = vlaneseq
      %v1031 = vshrl.u32 %v1030, 7
      %v1032 = vsub.s32 3, %v1031
      %v1033 = vrot.slane %v437, %v1032
      %v1034 = vmul.f32 %v1029, %v1022
      %v1035 = vmul.f32 %v1033, %v1023
      %v1036 = vlaneseq
      %v1037 = vshrl.u32 %v1036, 7
      %v1038 = vsub.s32 4, %v1037
      %v1039 = vrot.slane %v436, %v1038
      %v1040 = vlaneseq
      %v1041 = vshrl.u32 %v1040, 7
      %v1042 = vsub.s32 4, %v1041
      %v1043 = vrot.slane %v437, %v1042
      %v1044 = vmul.f32 %v1039, %v1024
      %v1045 = vmul.f32 %v1043, %v1025
      %v1046 = vadd.f32 %v1034, %v1044
      %v1047 = vadd.f32 %v1035, %v1045
      %v1048 = vlaneseq
      %v1049 = vshrl.u32 %v1048, 7
      %v1050 = vsub.s32 5, %v1049
      %v1051 = vrot.slane %v436, %v1050
      %v1052 = vlaneseq
      %v1053 = vshrl.u32 %v1052, 7
      %v1054 = vsub.s32 5, %v1053
      %v1055 = vrot.slane %v437, %v1054
      %v1056 = vmul.f32 %v1051, %v857
      %v1057 = vmul.f32 %v1055, %v858
      %v1058 = vadd.f32 %v1046, %v1056
      %v1059 = vadd.f32 %v1047, %v1057
      %v1060 = vld [vmem:[%s8] sm:$0xff]
      %v1061 = vld [vmem:[%s8 + $0x8] sm:$0xff]
      %v1062 = vld [vmem:[%s8 + $0x10] sm:$0xff]
      %v1063 = vld [vmem:[%s8 + $0x18] sm:$0xff]
      %v1064 = vld [vmem:[%s9] sm:$0xff]
      %v1065 = vld [vmem:[%s9 + $0x8] sm:$0xff]
      %v1066 = vld [vmem:[%s9 + $0x10] sm:$0xff]
      %v1067 = vld [vmem:[%s9 + $0x18] sm:$0xff]
      %1069 = vset.pattern.permute.xlu0 0
      %1070 = vperm.xlu0 %1069, %v1064
      %v1071 = vpop.permute.xlu0 %1070
      %1074 = vset.pattern.permute.xlu0 0
      %1075 = vperm.xlu0 %1074, %v1065
      %v1076 = vpop.permute.xlu0 %1075
      %1079 = vset.pattern.permute.xlu0 0
      %1080 = vperm.xlu0 %1079, %v1066
      %v1081 = vpop.permute.xlu0 %1080
      %1084 = vset.pattern.permute.xlu0 0
      %1085 = vperm.xlu0 %1084, %v1067
      %v1086 = vpop.permute.xlu0 %1085
      %vm1088 = vcmask 64512
      %v1090 = vsel %vm1088, %v1060, 0
      %v1093 = vsel %vm1088, %v1061, 0
      %v1096 = vsel %vm1088, %v1062, 0
      %v1099 = vsel %vm1088, %v1063, 0
      %1101 = vmatprep.subr.mxu0 0.0
      %1102 = vmatpush1.msra.mxu0 0.0
      %1103 = vmatprep.subr.mxu0 0.0
      %1104 = vmatpush1.msra.mxu0 0.0
      %1105 = vmatprep.subr.mxu0 0.0
      %1106 = vmatpush1.msra.mxu0 0.0
      %1107 = vmatprep.subr.mxu0 0.0
      %1108 = vmatpush1.msra.mxu0 0.0
      %1109 = vmatprep.subr.mxu0 0.0
      %1110 = vmatpush1.msra.mxu0 0.0
      %1111 = vmatprep.subr.mxu0 0.0
      %1112 = vmatpush1.msra.mxu0 0.0
      %1113 = vmatprep.subr.mxu0 0.0
      %1114 = vmatpush1.msra.mxu0 0.0
      %1115 = vmatprep.subr.mxu0 0.0
      %1116 = vmatpush1.msra.mxu0 0.0
      %1117 = vmatprep.subr.mxu0 0.0
      %1118 = vmatpush1.msra.mxu0 0.0
      %1119 = vmatprep.subr.mxu0 0.0
      %1120 = vmatpush1.msra.mxu0 0.0
      %1121 = vmatprep.subr.mxu0 0.0
      %1122 = vmatpush1.msra.mxu0 0.0
      %1123 = vmatprep.subr.mxu0 0.0
      %1124 = vmatpush1.msra.mxu0 0.0
      %1125 = vmatprep.subr.mxu0 0.0
      %1126 = vmatpush1.msra.mxu0 0.0
      %1127 = vmatprep.subr.mxu0 0.0
      %1128 = vmatpush1.msra.mxu0 0.0
      %1129 = vmatprep.subr.mxu0 0.0
      %1130 = vmatpush1.msra.mxu0 0.0
      %1131 = vmatprep.subr.mxu0 %v1059
      %1132 = vmatpush1.msra.mxu0 %v1058
      %1133 = vmatprep.subr.mxu0 0.0
      %1134 = vmatpush2.msra.mxu0 0.0
      %1135 = vmatprep.subr.mxu0 0.0
      %1136 = vmatpush2.msra.mxu0 0.0
      %1137 = vmatprep.subr.mxu0 0.0
      %1138 = vmatpush2.msra.mxu0 0.0
      %1139 = vmatprep.subr.mxu0 0.0
      %1140 = vmatpush2.msra.mxu0 0.0
      %1141 = vmatprep.subr.mxu0 0.0
      %1142 = vmatpush2.msra.mxu0 0.0
      %1143 = vmatprep.subr.mxu0 0.0
      %1144 = vmatpush2.msra.mxu0 0.0
      %1145 = vmatprep.subr.mxu0 0.0
      %1146 = vmatpush2.msra.mxu0 0.0
      %1147 = vmatprep.subr.mxu0 0.0
      %1148 = vmatpush2.msra.mxu0 0.0
      %1149 = vmatprep.subr.mxu0 0.0
      %1150 = vmatpush2.msra.mxu0 0.0
      %1151 = vmatprep.subr.mxu0 0.0
      %1152 = vmatpush2.msra.mxu0 0.0
      %1153 = vmatprep.subr.mxu0 0.0
      %1154 = vmatpush2.msra.mxu0 0.0
      %1155 = vmatprep.subr.mxu0 0.0
      %1156 = vmatpush2.msra.mxu0 0.0
      %1157 = vmatprep.subr.mxu0 0.0
      %1158 = vmatpush2.msra.mxu0 0.0
      %1159 = vmatprep.subr.mxu0 0.0
      %1160 = vmatpush2.msra.mxu0 0.0
      %1161 = vmatprep.subr.mxu0 0.0
      %1162 = vmatpush2.msra.mxu0 0.0
      %1163 = vmatprep.subr.mxu0 0.0
      %1164 = vmatpush2.msra.mxu0 0.0
      %1165 = vmatprep.mubr.f32.mxu0 0.0
      %1166 = vmatmul.mubr.f32.gmra.mxu0 %v1090
      %v1167 = vpop.f32.mrf.mxu0
      %v1168 = vadd.f32 %v1071, %v1167
      %v1169 = vpop.f32.mrf.mxu0
      %v1170 = vadd.f32 %v1071, %v1169
      %1171 = vmatprep.mubr.f32.mxu0 0.0
      %1172 = vmatmul.mubr.f32.gmra.mxu0 %v1093
      %v1173 = vpop.f32.mrf.mxu0
      %v1174 = vadd.f32 %v1076, %v1173
      %v1175 = vpop.f32.mrf.mxu0
      %v1176 = vadd.f32 %v1076, %v1175
      %1177 = vmatprep.mubr.f32.mxu0 0.0
      %1178 = vmatmul.mubr.f32.gmra.mxu0 %v1096
      %v1179 = vpop.f32.mrf.mxu0
      %v1180 = vadd.f32 %v1081, %v1179
      %v1181 = vpop.f32.mrf.mxu0
      %v1182 = vadd.f32 %v1081, %v1181
      %1183 = vmatprep.mubr.f32.mxu0 0.0
      %1184 = vmatmul.mubr.f32.gmra.mxu0 %v1099
      %v1185 = vpop.f32.mrf.mxu0
      %v1186 = vadd.f32 %v1086, %v1185
      %v1187 = vpop.f32.mrf.mxu0
      %v1188 = vadd.f32 %v1086, %v1187
      %1189 = vdwg.mxu0
      %v1190 = vmax.f32 %v1168, 0.0
      %v1191 = vmax.f32 %v1170, 0.0
      %v1192 = vmax.f32 %v1174, 0.0
      %v1193 = vmax.f32 %v1176, 0.0
      %v1194 = vmax.f32 %v1180, 0.0
      %v1195 = vmax.f32 %v1182, 0.0
      %v1196 = vmax.f32 %v1186, 0.0
      %v1197 = vmax.f32 %v1188, 0.0
      %v1198 = vld [vmem:[%s3] sm:$0xff]
      %v1199 = vld [vmem:[%s3 + $0x8] sm:$0xff]
      %v1200 = vld [vmem:[%s3 + $0x10] sm:$0xff]
      %v1201 = vld [vmem:[%s3 + $0x18] sm:$0xff]
      %v1202 = vld [vmem:[%s3 + $0x20] sm:$0xff]
      %v1203 = vld [vmem:[%s3 + $0x28] sm:$0xff]
      %v1204 = vld [vmem:[%s3 + $0x30] sm:$0xff]
      %v1205 = vld [vmem:[%s3 + $0x38] sm:$0xff]
      %v1206 = vld [vmem:[%s3 + $0x40] sm:$0xff]
      %v1207 = vld [vmem:[%s3 + $0x48] sm:$0xff]
      %v1208 = vld [vmem:[%s3 + $0x50] sm:$0xff]
      %v1209 = vld [vmem:[%s3 + $0x58] sm:$0xff]
      %v1210 = vld [vmem:[%s3 + $0x60] sm:$0xff]
      %v1211 = vld [vmem:[%s3 + $0x68] sm:$0xff]
      %v1212 = vld [vmem:[%s3 + $0x70] sm:$0xff]
      %v1213 = vld [vmem:[%s3 + $0x78] sm:$0xff]
      %v1214 = vld [vmem:[%s3 + $0x80] sm:$0xff]
      %v1215 = vld [vmem:[%s3 + $0x88] sm:$0xff]
      %v1216 = vld [vmem:[%s3 + $0x90] sm:$0xff]
      %v1217 = vld [vmem:[%s3 + $0x98] sm:$0xff]
      %v1218 = vld [vmem:[%s3 + $0xa0] sm:$0xff]
      %v1219 = vld [vmem:[%s3 + $0xa8] sm:$0xff]
      %v1220 = vld [vmem:[%s3 + $0xb0] sm:$0xff]
      %v1221 = vld [vmem:[%s3 + $0xb8] sm:$0xff]
      %v1222 = vld [vmem:[%s3 + $0xc0] sm:$0xff]
      %v1223 = vld [vmem:[%s3 + $0xc8] sm:$0xff]
      %v1224 = vld [vmem:[%s3 + $0xd0] sm:$0xff]
      %v1225 = vld [vmem:[%s3 + $0xd8] sm:$0xff]
      %v1226 = vld [vmem:[%s3 + $0xe0] sm:$0xff]
      %v1227 = vld [vmem:[%s3 + $0xe8] sm:$0xff]
      %v1228 = vld [vmem:[%s3 + $0xf0] sm:$0xff]
      %v1229 = vld [vmem:[%s3 + $0xf8] sm:$0xff]
      %1230 = vmatprep.subr.mxu0 0.0
      %1231 = vmatpush1.msra.mxu0 %v1213
      %1232 = vmatprep.subr.mxu0 0.0
      %1233 = vmatpush1.msra.mxu0 %v1212
      %1234 = vmatprep.subr.mxu0 0.0
      %1235 = vmatpush1.msra.mxu0 %v1211
      %1236 = vmatprep.subr.mxu0 0.0
      %1237 = vmatpush1.msra.mxu0 %v1210
      %1238 = vmatprep.subr.mxu0 0.0
      %1239 = vmatpush1.msra.mxu0 %v1209
      %1240 = vmatprep.subr.mxu0 0.0
      %1241 = vmatpush1.msra.mxu0 %v1208
      %1242 = vmatprep.subr.mxu0 0.0
      %1243 = vmatpush1.msra.mxu0 %v1207
      %1244 = vmatprep.subr.mxu0 0.0
      %1245 = vmatpush1.msra.mxu0 %v1206
      %1246 = vmatprep.subr.mxu0 0.0
      %1247 = vmatpush1.msra.mxu0 %v1205
      %1248 = vmatprep.subr.mxu0 0.0
      %1249 = vmatpush1.msra.mxu0 %v1204
      %1250 = vmatprep.subr.mxu0 0.0
      %1251 = vmatpush1.msra.mxu0 %v1203
      %1252 = vmatprep.subr.mxu0 0.0
      %1253 = vmatpush1.msra.mxu0 %v1202
      %1254 = vmatprep.subr.mxu0 0.0
      %1255 = vmatpush1.msra.mxu0 %v1201
      %1256 = vmatprep.subr.mxu0 0.0
      %1257 = vmatpush1.msra.mxu0 %v1200
      %1258 = vmatprep.subr.mxu0 0.0
      %1259 = vmatpush1.msra.mxu0 %v1199
      %1260 = vmatprep.subr.mxu0 0.0
      %1261 = vmatpush1.msra.mxu0 %v1198
      %1262 = vmatprep.subr.mxu0 0.0
      %1263 = vmatpush2.msra.mxu0 %v1229
      %1264 = vmatprep.subr.mxu0 0.0
      %1265 = vmatpush2.msra.mxu0 %v1228
      %1266 = vmatprep.subr.mxu0 0.0
      %1267 = vmatpush2.msra.mxu0 %v1227
      %1268 = vmatprep.subr.mxu0 0.0
      %1269 = vmatpush2.msra.mxu0 %v1226
      %1270 = vmatprep.subr.mxu0 0.0
      %1271 = vmatpush2.msra.mxu0 %v1225
      %1272 = vmatprep.subr.mxu0 0.0
      %1273 = vmatpush2.msra.mxu0 %v1224
      %1274 = vmatprep.subr.mxu0 0.0
      %1275 = vmatpush2.msra.mxu0 %v1223
      %1276 = vmatprep.subr.mxu0 0.0
      %1277 = vmatpush2.msra.mxu0 %v1222
      %1278 = vmatprep.subr.mxu0 0.0
      %1279 = vmatpush2.msra.mxu0 %v1221
      %1280 = vmatprep.subr.mxu0 0.0
      %1281 = vmatpush2.msra.mxu0 %v1220
      %1282 = vmatprep.subr.mxu0 0.0
      %1283 = vmatpush2.msra.mxu0 %v1219
      %1284 = vmatprep.subr.mxu0 0.0
      %1285 = vmatpush2.msra.mxu0 %v1218
      %1286 = vmatprep.subr.mxu0 0.0
      %1287 = vmatpush2.msra.mxu0 %v1217
      %1288 = vmatprep.subr.mxu0 0.0
      %1289 = vmatpush2.msra.mxu0 %v1216
      %1290 = vmatprep.subr.mxu0 0.0
      %1291 = vmatpush2.msra.mxu0 %v1215
      %1292 = vmatprep.subr.mxu0 0.0
      %1293 = vmatpush2.msra.mxu0 %v1214
      %1294 = vmatprep.mubr.f32.mxu0 %v1191
      %1295 = vmatmul.mubr.f32.gmra.mxu0 %v1190
      %v1296 = vpop.f32.mrf.mxu0
      %v1297 = vadd.f32 0.0, %v1296
      %v1298 = vpop.f32.mrf.mxu0
      %1299 = vmatprep.mubr.f32.mxu0 %v1193
      %1300 = vmatmul.mubr.f32.gmra.mxu0 %v1192
      %v1301 = vpop.f32.mrf.mxu0
      %v1302 = vadd.f32 0.0, %v1301
      %v1303 = vpop.f32.mrf.mxu0
      %1304 = vmatprep.mubr.f32.mxu0 %v1195
      %1305 = vmatmul.mubr.f32.gmra.mxu0 %v1194
      %v1306 = vpop.f32.mrf.mxu0
      %v1307 = vadd.f32 0.0, %v1306
      %v1308 = vpop.f32.mrf.mxu0
      %1309 = vmatprep.mubr.f32.mxu0 %v1197
      %1310 = vmatmul.mubr.f32.gmra.mxu0 %v1196
      %v1311 = vpop.f32.mrf.mxu0
      %v1312 = vadd.f32 0.0, %v1311
      %v1313 = vpop.f32.mrf.mxu0
      %1314 = vdwg.mxu0
      %v1315 = vld [vmem:[%s10] sm:$0xff]
      %v1316 = vld [vmem:[%s10 + $0x8] sm:$0x3]
      %v1317 = vld [vmem:[%s11] sm:$0xff]
      %v1318 = vld [vmem:[%s11 + $0x8] sm:$0x3]
      %vm1319 = vcmask 261120
      %v1321 = vsel %vm1319, %v1315, 0
      %v1324 = vsel %vm1319, %v1316, 0
      %1326 = vmatprep.subr.mxu0 0.0
      %1327 = vmatpush1.msra.mxu0 0.0
      %1328 = vmatprep.subr.mxu0 0.0
      %1329 = vmatpush1.msra.mxu0 0.0
      %1330 = vmatprep.subr.mxu0 0.0
      %1331 = vmatpush1.msra.mxu0 0.0
      %1332 = vmatprep.subr.mxu0 0.0
      %1333 = vmatpush1.msra.mxu0 0.0
      %1334 = vmatprep.subr.mxu0 0.0
      %1335 = vmatpush1.msra.mxu0 0.0
      %1336 = vmatprep.subr.mxu0 0.0
      %1337 = vmatpush1.msra.mxu0 0.0
      %1338 = vmatprep.subr.mxu0 0.0
      %1339 = vmatpush1.msra.mxu0 0.0
      %1340 = vmatprep.subr.mxu0 0.0
      %1341 = vmatpush1.msra.mxu0 0.0
      %1342 = vmatprep.subr.mxu0 0.0
      %1343 = vmatpush1.msra.mxu0 0.0
      %1344 = vmatprep.subr.mxu0 0.0
      %1345 = vmatpush1.msra.mxu0 0.0
      %1346 = vmatprep.subr.mxu0 0.0
      %1347 = vmatpush1.msra.mxu0 0.0
      %1348 = vmatprep.subr.mxu0 0.0
      %1349 = vmatpush1.msra.mxu0 0.0
      %1350 = vmatprep.subr.mxu0 0.0
      %1351 = vmatpush1.msra.mxu0 %v1312
      %1352 = vmatprep.subr.mxu0 0.0
      %1353 = vmatpush1.msra.mxu0 %v1307
      %1354 = vmatprep.subr.mxu0 0.0
      %1355 = vmatpush1.msra.mxu0 %v1302
      %1356 = vmatprep.subr.mxu0 0.0
      %1357 = vmatpush1.msra.mxu0 %v1297
      %1358 = vmatprep.subr.mxu0 0.0
      %1359 = vmatpush2.msra.mxu0 0.0
      %1360 = vmatprep.subr.mxu0 0.0
      %1361 = vmatpush2.msra.mxu0 0.0
      %1362 = vmatprep.subr.mxu0 0.0
      %1363 = vmatpush2.msra.mxu0 0.0
      %1364 = vmatprep.subr.mxu0 0.0
      %1365 = vmatpush2.msra.mxu0 0.0
      %1366 = vmatprep.subr.mxu0 0.0
      %1367 = vmatpush2.msra.mxu0 0.0
      %1368 = vmatprep.subr.mxu0 0.0
      %1369 = vmatpush2.msra.mxu0 0.0
      %1370 = vmatprep.subr.mxu0 0.0
      %1371 = vmatpush2.msra.mxu0 0.0
      %1372 = vmatprep.subr.mxu0 0.0
      %1373 = vmatpush2.msra.mxu0 0.0
      %1374 = vmatprep.subr.mxu0 0.0
      %1375 = vmatpush2.msra.mxu0 0.0
      %1376 = vmatprep.subr.mxu0 0.0
      %1377 = vmatpush2.msra.mxu0 0.0
      %1378 = vmatprep.subr.mxu0 0.0
      %1379 = vmatpush2.msra.mxu0 0.0
      %1380 = vmatprep.subr.mxu0 0.0
      %1381 = vmatpush2.msra.mxu0 0.0
      %1382 = vmatprep.subr.mxu0 0.0
      %1383 = vmatpush2.msra.mxu0 0.0
      %1384 = vmatprep.subr.mxu0 0.0
      %1385 = vmatpush2.msra.mxu0 0.0
      %1386 = vmatprep.subr.mxu0 0.0
      %1387 = vmatpush2.msra.mxu0 0.0
      %1388 = vmatprep.subr.mxu0 0.0
      %1389 = vmatpush2.msra.mxu0 0.0
      %1390 = vmatprep.mubr.f32.mxu0 0.0
      %1391 = vmatmul.mubr.f32.gmra.mxu0 %v1321
      %v1392 = vpop.f32.mrf.mxu0
      %v1393 = vadd.f32 %v1317, %v1392
      %v1394 = vpop.f32.mrf.mxu0
      %1395 = vmatprep.mubr.f32.mxu0 0.0
      %1396 = vmatmul.mubr.f32.gmra.mxu0 %v1324
      %v1397 = vpop.f32.mrf.mxu0
      %v1398 = vadd.f32 %v1318, %v1397
      %v1399 = vpop.f32.mrf.mxu0
      %1400 = vdwg.mxu0
      %1401 = vxpose.xlu0.b32.start [1/16] %v1393, 128
      %1402 = vxpose.xlu0.b32.cont [2/16] %v1398, 128
      %1403 = vxpose.xlu0.b32.cont [3/16] 0.0, 128
      %1404 = vxpose.xlu0.b32.cont [4/16] 0.0, 128
      %1405 = vxpose.xlu0.b32.cont [5/16] 0.0, 128
      %1406 = vxpose.xlu0.b32.cont [6/16] 0.0, 128
      %1407 = vxpose.xlu0.b32.cont [7/16] 0.0, 128
      %1408 = vxpose.xlu0.b32.cont [8/16] 0.0, 128
      %1409 = vxpose.xlu0.b32.cont [9/16] 0.0, 128
      %1410 = vxpose.xlu0.b32.cont [10/16] 0.0, 128
      %1411 = vxpose.xlu0.b32.cont [11/16] 0.0, 128
      %1412 = vxpose.xlu0.b32.cont [12/16] 0.0, 128
      %1413 = vxpose.xlu0.b32.cont [13/16] 0.0, 128
      %1414 = vxpose.xlu0.b32.cont [14/16] 0.0, 128
      %1415 = vxpose.xlu0.b32.cont [15/16] 0.0, 128
      %1416 = vxpose.xlu0.b32.end [16/16] 0.0, 128
      %v1417 = vpop.trf.xlu0
      %v1418 = vpop.trf.xlu0
      %v1419 = vpop.trf.xlu0
      %v1420 = vpop.trf.xlu0
      %v1421 = vpop.trf.xlu0
      %v1422 = vpop.trf.xlu0
      %v1423 = vpop.trf.xlu0
      %v1424 = vpop.trf.xlu0
      %v1425 = vpop.trf.xlu0
      %v1426 = vpop.trf.xlu0
      %v1427 = vpop.trf.xlu0
      %v1428 = vpop.trf.xlu0
      %v1429 = vpop.trf.xlu0
      %v1430 = vpop.trf.xlu0
      %v1431 = vpop.trf.xlu0
      %v1432 = vpop.trf.xlu0
      %vm1433 = vcmask 73728
      %1434 = vst.msk [vmem:[%s429] sm:$0x1] %vm1433, %v1417
      %p1435 = scmp.lt.s32.totalorder %s23, 1
      %s1436 = scalar_select %p1435, %s23, 1
      %s1437 = scalar_lea.vmem %s12, %s1436
      // Predicated region
      $region69: #{fbnet_forward.1} parent=67 // pred_check
        %p1438 = pneg %p303
      $region70: #{fbnet_forward.1} parent=67 // pred_check_branch
        %1440 = sbr.rel (%p1438) target = $region72
      $region71: #{fbnet_forward.1} parent=67 // pred_region
        _
      $region72: #{fbnet_forward.1} parent=67 // pred_fallthru
        _
    $region68: #{fbnet_forward.1} parent=5 // pred_fallthru
      _
    %p1441 = scmp.le.s32.totalorder 2, %s18
    // Predicated region
    $region73: #{fbnet_forward.1} parent=5 // pred_check
      %p1442 = pneg %p1441
    $region74: #{fbnet_forward.1} parent=5 // pred_check_branch
      %1444 = sbr.rel (%p1442) target = $region76
    $region75: #{fbnet_forward.1} parent=5 // pred_region
      %s1445 = ssub.s32 %s18, 2
      // Predicated region
      $region77: #{fbnet_forward.1} parent=75 // pred_check
        %p1446 = pneg %p309
      $region78: #{fbnet_forward.1} parent=75 // pred_check_branch
        %1448 = sbr.rel (%p1446) target = $region80
      $region79: #{fbnet_forward.1} parent=75 // pred_region
        %p1449 = scmp.lt.s32.totalorder %s24, 1
        %s1450 = scalar_select %p1449, %s24, 1
        %s1451 = scalar_lea.vmem %s12, %s1450
      $region80: #{fbnet_forward.1} parent=75 // pred_fallthru
        _
    $region76: #{fbnet_forward.1} parent=5 // pred_fallthru
      _
  $region6: #{fbnet_forward.1} parent=0 // loop_footer
    %s22 = sadd.s32 1, %s18
  $region7: #{fbnet_forward.1} parent=0 // loop_footer_branch
    %17 = sbr.rel target = $region3
  $region8: #{fbnet_forward.1} parent=0 // loop_exit
    _

</llo_original>
